<compile_context>
chip_gen: v7x
topology: tpu7x:2x2x1
jax: 0.10.0
libtpu: 0.0.40
codegen_flags: <defaults>
</compile_context>

<pallas_src>
import functools
import math

import jax
import jax.numpy as jnp
from jax import lax
from jax.experimental import pallas as pl
from jax.experimental.pallas import tpu as pltpu

# ------------------------- configuration -------------------------
NUM_EVENTS = 4
D_INPUT = 32
D_RNN = 16        # unused (see TODO above)
D_HIDDEN = 64
N_LAYERS = 2
N_HEAD = 2
D_QK = 16
D_V = 16
RESOLUTION = 10
B, S = 2, 8
MAX_M_TILE = 1024  # rows per grid step when batch*seq is large (fits v5e/v7x VMEM)
LANE = 128


def _round_up(x, m):
    return (x + m - 1) // m * m


# ------------------------- small math helpers -------------------------
def _erf(x):
    # Abramowitz & Stegun 7.1.26 rational approximation, |err| < 1.5e-7
    a1, a2, a3, a4, a5 = 0.254829592, -0.284496736, 1.421413741, -1.453152027, 1.061405429
    p = 0.3275911
    ax = jnp.abs(x)
    t = 1.0 / (1.0 + p * ax)
    poly = ((((a5 * t + a4) * t + a3) * t + a2) * t + a1) * t
    y = 1.0 - poly * jnp.exp(-ax * ax)
    return jnp.where(x >= 0.0, y, -y)


def _gelu_erf(x):
    # torch.nn.GELU() default (erf-based) -- used only in the plain-JAX reference.
    return 0.5 * x * (1.0 + _erf(x * (1.0 / math.sqrt(2.0))))


_GELU_C = math.sqrt(2.0 / math.pi)


def _gelu_tanh(x):
    # tanh-approximation GELU: one EUP tanh + short polynomial (kernel fast path).
    return 0.5 * x * (1.0 + jnp.tanh(_GELU_C * (x + 0.044715 * x * x * x)))


def _softplus(x, beta):
    # torch.nn.Softplus(beta): (1/beta) * log(1 + exp(beta*x)), linear above threshold 20.
    inv_beta = 1.0 / beta
    bx = beta * x
    return jnp.where(bx > 20.0, x, jnp.log(1.0 + jnp.exp(jnp.minimum(bx, 20.0))) * inv_beta)


# ------------------------- Pallas kernel: SAHP head (fused + MC-batched) -------------------------
def sahp_head_kernel(h_ref, t_ref,
                     w_emg_ref, b_emg_ref,
                     e_gm_ref, e_sp_ref,
                     wi_blk_ref, bi_blk_ref, post_ref,
                     out_ref, *, num_events, rd):
    h = h_ref[...]                                     # [M, D]
    t = t_ref[...]                                     # [M, 1]

    # fused start/converge/decay projection, one MXU pass.
    # lane tile 0 = [eta | mu | 0...], lane tile 1 = [gamma | 0...]
    proj = jnp.dot(h, w_emg_ref[...], preferred_element_type=jnp.float32) + b_emg_ref[...]  # [M, 256]

    # lane-tile-aligned activation split: GELU only where needed, Softplus only where needed.
    gm = _gelu_tanh(proj[:, :LANE])                    # [M, 128]  (eta | mu | 0)
    sp = _softplus(proj[:, LANE:], 10.0)               # [M, 128]  (gamma | junk, ignored)

    # one matmul produces [mu_rep | (eta-mu)_rep] for all MC samples, one produces
    # gamma_rep with the MC multiplier folded in; t applied afterwards (per-row scalar).
    md = jnp.dot(gm, e_gm_ref[...], preferred_element_type=jnp.float32)    # [M, 2*RD]
    gd = jnp.dot(sp, e_sp_ref[...], preferred_element_type=jnp.float32) * t  # [M, RD]
    mu_rep = md[:, :rd]
    diff_rep = md[:, rd:]

    # state decay + intensity for all MC samples in one dense block
    cell = jnp.tanh(mu_rep + diff_rep * jnp.exp(-gd))                       # [M, RD]
    z = jnp.dot(cell, wi_blk_ref[...], preferred_element_type=jnp.float32) + bi_blk_ref[...]
    lam = _softplus(z, 1.0)                                                 # [M, 128]

    # one MXU pass reduces lam -> lane-dense packed [integral/t | intensity | 0...];
    # the constant rectangle width 1/(R-1) is folded into post.
    pre = jnp.dot(lam, post_ref[...], preferred_element_type=jnp.float32)   # [M, 128]
    ocol = lax.broadcasted_iota(jnp.int32, pre.shape, 1)
    out_ref[...] = pre * jnp.where(ocol < num_events, t, 1.0)               # single full-tile store


def prepare_head_params(head, resolution, d_input, num_events):
    """Precompute fused / replicated constant matrices for the Pallas head kernel."""
    r, d, ne = resolution, d_input, num_events
    f32 = jnp.float32
    assert 2 * d <= LANE, "eta|mu must fit one lane tile"
    rd = _round_up(r * d, LANE)                        # MC axis padded so rd % 128 == 0 (384)
    lam_w = _round_up(r * ne, LANE)                    # padded intensity lane width (128)
    out_w = LANE                                       # lane-dense packed output width

    # fused projection: lane tile 0 = [ws | wc | 0...], lane tile 1 = [wd | 0...]
    w_emg = jnp.zeros((d, 2 * LANE), f32)
    w_emg = w_emg.at[:, 0:d].set(head['ws'])
    w_emg = w_emg.at[:, d:2 * d].set(head['wc'])
    w_emg = w_emg.at[:, LANE:LANE + d].set(head['wd'])
    b_emg = jnp.zeros((1, 2 * LANE), f32)
    b_emg = b_emg.at[:, 0:d].set(head['bs'])
    b_emg = b_emg.at[:, d:2 * d].set(head['bc'])
    b_emg = b_emg.at[:, LANE:LANE + d].set(head['bd'])

    # replication matrices (zero columns for the pad samples -> no junk lanes)
    eye_d = jnp.eye(d, dtype=f32)
    rep = jnp.zeros((d, rd), f32)
    rep = rep.at[:, :r * d].set(jnp.tile(eye_d, (1, r)))                     # [D, RD]
    mult = jnp.linspace(0.0, 1.0, r, dtype=f32)                              # MC sample positions
    repm = jnp.zeros((d, rd), f32)
    repm = repm.at[:, :r * d].set(jnp.tile(eye_d, (1, r)) * jnp.repeat(mult, d)[None, :])

    # from the GELU tile: [mu_rep | (eta-mu)_rep]
    e_gm = jnp.zeros((LANE, 2 * rd), f32)
    e_gm = e_gm.at[d:2 * d, :rd].set(rep)              # mu rows -> mu_rep
    e_gm = e_gm.at[0:d, rd:].set(rep)                  # eta rows -> +eta
    e_gm = e_gm.at[d:2 * d, rd:].set(-rep)             # mu rows  -> -mu
    # from the Softplus tile: gamma_rep with the MC multiplier folded in
    e_sp = jnp.zeros((LANE, rd), f32)
    e_sp = e_sp.at[0:d, :].set(repm)

    # block-diagonal intensity layer across the real MC samples, padded to a full lane tile
    wi_blk = jnp.zeros((rd, lam_w), f32)
    bi_blk = jnp.zeros((1, lam_w), f32)
    for i in range(r):
        wi_blk = wi_blk.at[i * d:(i + 1) * d, i * ne:(i + 1) * ne].set(head['wi'])
        bi_blk = bi_blk.at[:, i * ne:(i + 1) * ne].set(head['bi'])

    # reduction -> packed [integral/t | intensity | 0 ...]; rectangle width 1/(R-1) folded in
    dt_c = 1.0 / (r - 1)
    eye_ne = jnp.eye(ne, dtype=f32)
    post = jnp.zeros((lam_w, out_w), f32)
    for i in range(r - 1):
        post = post.at[i * ne:(i + 1) * ne, 0:ne].set(dt_c * eye_ne)
    post = post.at[(r - 1) * ne:r * ne, ne:2 * ne].set(eye_ne)

    return {'w_emg': w_emg, 'b_emg': b_emg, 'e_gm': e_gm, 'e_sp': e_sp,
            'wi_blk': wi_blk, 'bi_blk': bi_blk, 'post': post}


def sahp_head_pallas(history, time_next, hk, num_events):
    """history: [B, S, D]; time_next: [B, S] -> (integral [B,S,NE], intensity [B,S,NE])."""
    b, s, d = history.shape
    ne = num_events
    bs = b * s
    rd = hk['e_sp'].shape[1]                           # static (derived from array shape)

    if bs <= MAX_M_TILE:
        m_tile = _round_up(bs, 8)                      # single grid step: weights DMA'd once
        steps = 1
    else:
        m_tile = MAX_M_TILE
        steps = pl.cdiv(bs, m_tile)
        steps += steps % 2                             # even step count -> balanced on v7x's 2 TCs
    m_tot = steps * m_tile

    h2 = history.reshape(bs, d).astype(jnp.float32)
    t2 = time_next.reshape(bs, 1).astype(jnp.float32)
    if m_tot != bs:
        h2 = jnp.pad(h2, ((0, m_tot - bs), (0, 0)))
        t2 = jnp.pad(t2, ((0, m_tot - bs), (0, 0)))

    kernel = functools.partial(sahp_head_kernel, num_events=ne, rd=rd)
    row = lambda w: pl.BlockSpec((m_tile, w), lambda i: (i, 0))
    whole = lambda a: pl.BlockSpec(a.shape, lambda i: (0, 0))   # constant block, DMA'd once

    out = pl.pallas_call(
        kernel,
        grid=(steps,),
        in_specs=[
            row(d),                  # history rows
            row(1),                  # time_next rows
            whole(hk['w_emg']), whole(hk['b_emg']),
            whole(hk['e_gm']), whole(hk['e_sp']),
            whole(hk['wi_blk']), whole(hk['bi_blk']), whole(hk['post']),
        ],
        out_specs=row(LANE),
        out_shape=jax.ShapeDtypeStruct((m_tot, LANE), jnp.float32),
        compiler_params=pltpu.CompilerParams(
            dimension_semantics=("parallel",),
            vmem_limit_bytes=48 * 1024 * 1024),
    )(h2, t2, hk['w_emg'], hk['b_emg'], hk['e_gm'], hk['e_sp'],
      hk['wi_blk'], hk['bi_blk'], hk['post'])

    integral = out[:bs, :ne].reshape(b, s, ne)
    intensity = out[:bs, ne:2 * ne].reshape(b, s, ne)
    return integral, intensity


# ------------------------- plain-JAX reference of the head (sanity check) -------------------------
def sahp_head_reference(history, time_next, p, resolution):
    eta = _gelu_erf(history @ p['ws'] + p['bs'])
    mu = _gelu_erf(history @ p['wc'] + p['bc'])
    gamma = _softplus(history @ p['wd'] + p['bd'], 10.0)

    # intensity at time_next (duration_t rank-2 branch of state_decay)
    cell_t = jnp.tanh(mu + (eta - mu) * jnp.exp(-gamma * time_next[..., None]))
    intensity = _softplus(cell_t @ p['wi'] + p['bi'], 1.0)

    # monte_carlo_integration_estimator
    mult = jnp.linspace(0.0, 1.0, resolution)
    expanded_time = time_next[..., None] * mult                      # [B,S,R]
    mu4, eta4, g4 = (a[:, :, None, :] for a in (mu, eta, gamma))
    cell = jnp.tanh(mu4 + (eta4 - mu4) * jnp.exp(-g4 * expanded_time[..., None]))
    lam = _softplus(cell @ p['wi'] + p['bi'], 1.0)                   # [B,S,R,NE]
    lam_mc = jnp.concatenate([lam[:, :, :1, :], lam[:, :, :-1, :]], axis=2)
    ts = jnp.concatenate([jnp.zeros_like(time_next)[..., None],
                          jnp.diff(expanded_time, axis=-1)], axis=-1)
    integral = (lam_mc * ts[..., None]).sum(axis=-2)
    return integral, intensity


# ------------------------- plain-JAX THP-style history encoder (glue) -------------------------
def _layer_norm(x, g, b, eps=1e-5):
    m = x.mean(-1, keepdims=True)
    v = ((x - m) ** 2).mean(-1, keepdims=True)
    return (x - m) / jnp.sqrt(v + eps) * g + b


def _temporal_encoding(t, d):
    i = jnp.arange(d)
    div = jnp.power(10000.0, 2.0 * (i // 2) / d)
    ang = t[..., None] / div
    return jnp.where(i % 2 == 0, jnp.sin(ang), jnp.cos(ang))


def transformer_encoder(params, time_history, events_history, mask_history):
    mask = mask_history.astype(jnp.float32)
    x = params['event_emb'][events_history] + _temporal_encoding(time_history, D_INPUT) * mask[..., None]
    bsz, seq, d = x.shape
    causal = jnp.tril(jnp.ones((seq, seq), jnp.bool_))
    attn_mask = causal[None, :, :] & (mask_history.astype(jnp.bool_)[:, None, :])
    for layer in params['layers']:
        q = (x @ layer['wq']).reshape(bsz, seq, N_HEAD, D_QK).transpose(0, 2, 1, 3)
        k = (x @ layer['wk']).reshape(bsz, seq, N_HEAD, D_QK).transpose(0, 2, 1, 3)
        v = (x @ layer['wv']).reshape(bsz, seq, N_HEAD, D_V).transpose(0, 2, 1, 3)
        scores = jnp.einsum('bhqd,bhkd->bhqk', q, k) / math.sqrt(D_QK)
        scores = jnp.where(attn_mask[:, None, :, :], scores, -1e9)
        attn = jax.nn.softmax(scores, axis=-1)
        ctx = jnp.einsum('bhqk,bhkd->bhqd', attn, v).transpose(0, 2, 1, 3).reshape(bsz, seq, N_HEAD * D_V)
        x = _layer_norm(x + ctx @ layer['wo'], layer['ln1_g'], layer['ln1_b'])
        ff = jax.nn.relu(x @ layer['w1'] + layer['b1']) @ layer['w2'] + layer['b2']
        x = _layer_norm(x + ff, layer['ln2_g'], layer['ln2_b'])
        x = x * mask[..., None]
    return x


# ------------------------- parameter initialization (deterministic, synthetic) -------------------------
def init_params(key):
    keys = jax.random.split(key, 32)
    ki = iter(keys)

    def lin(k, fan_in, fan_out):
        return jax.random.normal(k, (fan_in, fan_out), jnp.float32) / math.sqrt(fan_in)

    head = {
        'ws': lin(next(ki), D_INPUT, D_INPUT), 'bs': jnp.zeros((1, D_INPUT), jnp.float32),
        'wc': lin(next(ki), D_INPUT, D_INPUT), 'bc': jnp.zeros((1, D_INPUT), jnp.float32),
        'wd': lin(next(ki), D_INPUT, D_INPUT), 'bd': jnp.zeros((1, D_INPUT), jnp.float32),
        'wi': lin(next(ki), D_INPUT, NUM_EVENTS), 'bi': jnp.zeros((1, NUM_EVENTS), jnp.float32),
    }
    enc = {'event_emb': 0.1 * jax.random.normal(next(ki), (NUM_EVENTS + 1, D_INPUT), jnp.float32),
           'layers': []}
    for _ in range(N_LAYERS):
        lk = jax.random.split(next(ki), 8)
        enc['layers'].append({
            'wq': lin(lk[0], D_INPUT, N_HEAD * D_QK),
            'wk': lin(lk[1], D_INPUT, N_HEAD * D_QK),
            'wv': lin(lk[2], D_INPUT, N_HEAD * D_V),
            'wo': lin(lk[3], N_HEAD * D_V, D_INPUT),
            'w1': lin(lk[4], D_INPUT, D_HIDDEN), 'b1': jnp.zeros((D_HIDDEN,), jnp.float32),
            'w2': lin(lk[5], D_HIDDEN, D_INPUT), 'b2': jnp.zeros((D_INPUT,), jnp.float32),
            'ln1_g': jnp.ones((D_INPUT,), jnp.float32), 'ln1_b': jnp.zeros((D_INPUT,), jnp.float32),
            'ln2_g': jnp.ones((D_INPUT,), jnp.float32), 'ln2_b': jnp.zeros((D_INPUT,), jnp.float32),
        })
    head_kernel = prepare_head_params(head, RESOLUTION, D_INPUT, NUM_EVENTS)
    return {'head': head, 'head_kernel': head_kernel, 'encoder': enc}


# ------------------------- full SAHP forward -------------------------
def sahp_forward(params, time_history, time_next, events_history, mask_history):
    history = transformer_encoder(params['encoder'], time_history, events_history, mask_history)
    integral_all_events, intensity_all_events = sahp_head_pallas(
        history, time_next, params['head_kernel'], NUM_EVENTS)
    return integral_all_events, intensity_all_events


if __name__ == "__main__":
    key = jax.random.PRNGKey(0)
    k_par, k_th, k_tn, k_ev, k_mask = jax.random.split(key, 5)

    params = init_params(k_par)

    time_history = jnp.cumsum(jax.random.uniform(k_th, (B, S), jnp.float32, 0.1, 1.0), axis=-1)
    time_next = jax.random.uniform(k_tn, (B, S), jnp.float32, 0.05, 1.5)
    events_history = jax.random.randint(k_ev, (B, S), 0, NUM_EVENTS)
    mask_history = jnp.ones((B, S), jnp.int32).at[1, -2:].set(0)   # some padding in batch 1

    integral, intensity = jax.jit(sahp_forward)(params, time_history, time_next,
                                                events_history, mask_history)
    jax.block_until_ready((integral, intensity))

    # sanity check against plain-JAX reference of the head (erf-based GELU, as in torch.nn.GELU)
    history = transformer_encoder(params['encoder'], time_history, events_history, mask_history)
    ref_integral, ref_intensity = sahp_head_reference(history, time_next, params['head'], RESOLUTION)
    assert integral.shape == (B, S, NUM_EVENTS) and intensity.shape == (B, S, NUM_EVENTS)
    assert jnp.allclose(integral, ref_integral, atol=1e-2, rtol=1e-2)
    assert jnp.allclose(intensity, ref_intensity, atol=1e-2, rtol=1e-2)

    print("KERNEL_OK")
</pallas_src>

<mosaic_0001>
module attributes {stable_mosaic.version = 11 : i64} {
  func.func @sahp_head_kernel(%arg0: i32, %arg1: memref<16x32xf32, #tpu.memory_space<vmem>>, %arg2: memref<16x1xf32, #tpu.memory_space<vmem>>, %arg3: memref<32x256xf32, #tpu.memory_space<vmem>>, %arg4: memref<1x256xf32, #tpu.memory_space<vmem>>, %arg5: memref<128x768xf32, #tpu.memory_space<vmem>>, %arg6: memref<128x384xf32, #tpu.memory_space<vmem>>, %arg7: memref<384x128xf32, #tpu.memory_space<vmem>>, %arg8: memref<1x128xf32, #tpu.memory_space<vmem>>, %arg9: memref<128x128xf32, #tpu.memory_space<vmem>>, %arg10: memref<16x128xf32, #tpu.memory_space<vmem>>) attributes {dimension_semantics = [#tpu.dimension_semantics<parallel>], iteration_bounds = array<i64: 1>, scalar_prefetch = 0 : i64, scratch_operands = 0 : i64, tpu.core_type = #tpu.core_type<tc>, window_params = [{transform_indices = @transform_0, window_bounds = array<i64: 16, 32>}, {transform_indices = @transform_1, window_bounds = array<i64: 16, 1>}, {pipeline_mode = #tpu.pipeline_mode<synchronous>, transform_indices = @transform_2, window_bounds = array<i64: 32, 256>}, {pipeline_mode = #tpu.pipeline_mode<synchronous>, transform_indices = @transform_3, window_bounds = array<i64: 1, 256>}, {pipeline_mode = #tpu.pipeline_mode<synchronous>, transform_indices = @transform_4, window_bounds = array<i64: 128, 768>}, {pipeline_mode = #tpu.pipeline_mode<synchronous>, transform_indices = @transform_5, window_bounds = array<i64: 128, 384>}, {pipeline_mode = #tpu.pipeline_mode<synchronous>, transform_indices = @transform_6, window_bounds = array<i64: 384, 128>}, {pipeline_mode = #tpu.pipeline_mode<synchronous>, transform_indices = @transform_7, window_bounds = array<i64: 1, 128>}, {pipeline_mode = #tpu.pipeline_mode<synchronous>, transform_indices = @transform_8, window_bounds = array<i64: 128, 128>}, {transform_indices = @transform_9, window_bounds = array<i64: 16, 128>}]} {
    %c0 = arith.constant 0 : index
    %c0_0 = arith.constant 0 : index
    %0 = vector.load %arg1[%c0, %c0_0] : memref<16x32xf32, #tpu.memory_space<vmem>>, vector<16x32xf32>
    %c0_1 = arith.constant 0 : index
    %c0_2 = arith.constant 0 : index
    %1 = vector.load %arg2[%c0_1, %c0_2] : memref<16x1xf32, #tpu.memory_space<vmem>>, vector<16x1xf32>
    %c0_3 = arith.constant 0 : index
    %c0_4 = arith.constant 0 : index
    %2 = vector.load %arg3[%c0_3, %c0_4] : memref<32x256xf32, #tpu.memory_space<vmem>>, vector<32x256xf32>
    %cst = arith.constant dense<0.000000e+00> : vector<16x256xf32>
    %3 = tpu.matmul %0, %2, %cst {dimension_numbers = #tpu.dot_dimension_numbers<[1], [0], [0], [1], [0, 0, 1, 1], [], []>} : vector<16x32xf32>, vector<32x256xf32>, vector<16x256xf32> -> vector<16x256xf32>
    %c0_5 = arith.constant 0 : index
    %c0_6 = arith.constant 0 : index
    %4 = vector.load %arg4[%c0_5, %c0_6] : memref<1x256xf32, #tpu.memory_space<vmem>>, vector<1x256xf32>
    %5 = vector.broadcast %4 : vector<1x256xf32> to vector<16x256xf32>
    %6 = arith.addf %3, %5 : vector<16x256xf32>
    %7 = vector.extract_strided_slice %6 {offsets = [0, 0], sizes = [16, 128], strides = [1, 1]} : vector<16x256xf32> to vector<16x128xf32>
    %cst_7 = arith.constant 5.000000e-01 : f32
    %8 = vector.broadcast %cst_7 : f32 to vector<16x128xf32>
    %9 = arith.mulf %8, %7 : vector<16x128xf32>
    %cst_8 = arith.constant 4.471500e-02 : f32
    %10 = vector.broadcast %cst_8 : f32 to vector<16x128xf32>
    %11 = arith.mulf %10, %7 : vector<16x128xf32>
    %12 = arith.mulf %11, %7 : vector<16x128xf32>
    %13 = arith.mulf %12, %7 : vector<16x128xf32>
    %14 = arith.addf %7, %13 : vector<16x128xf32>
    %cst_9 = arith.constant 0.797884583 : f32
    %15 = vector.broadcast %cst_9 : f32 to vector<16x128xf32>
    %16 = arith.mulf %15, %14 : vector<16x128xf32>
    %17 = math.tanh %16 : vector<16x128xf32>
    %cst_10 = arith.constant 1.000000e+00 : f32
    %18 = vector.broadcast %cst_10 : f32 to vector<16x128xf32>
    %19 = arith.addf %18, %17 : vector<16x128xf32>
    %20 = arith.mulf %9, %19 : vector<16x128xf32>
    %21 = vector.extract_strided_slice %6 {offsets = [0, 128], sizes = [16, 128], strides = [1, 1]} : vector<16x256xf32> to vector<16x128xf32>
    %cst_11 = arith.constant 1.000000e+01 : f32
    %22 = vector.broadcast %cst_11 : f32 to vector<16x128xf32>
    %23 = arith.mulf %22, %21 : vector<16x128xf32>
    %cst_12 = arith.constant 2.000000e+01 : f32
    %24 = vector.broadcast %cst_12 : f32 to vector<16x128xf32>
    %25 = arith.cmpf ogt, %23, %24 : vector<16x128xf32>
    %cst_13 = arith.constant 2.000000e+01 : f32
    %26 = vector.broadcast %cst_13 : f32 to vector<16x128xf32>
    %27 = arith.minimumf %23, %26 : vector<16x128xf32>
    %28 = math.exp %27 : vector<16x128xf32>
    %cst_14 = arith.constant 1.000000e+00 : f32
    %29 = vector.broadcast %cst_14 : f32 to vector<16x128xf32>
    %30 = arith.addf %29, %28 : vector<16x128xf32>
    %31 = math.log %30 : vector<16x128xf32>
    %cst_15 = arith.constant 1.000000e-01 : f32
    %32 = vector.broadcast %cst_15 : f32 to vector<16x128xf32>
    %33 = arith.mulf %31, %32 : vector<16x128xf32>
    %34 = arith.select %25, %21, %33 : vector<16x128xi1>, vector<16x128xf32>
    %c0_16 = arith.constant 0 : index
    %c0_17 = arith.constant 0 : index
    %35 = vector.load %arg5[%c0_16, %c0_17] : memref<128x768xf32, #tpu.memory_space<vmem>>, vector<128x768xf32>
    %cst_18 = arith.constant dense<0.000000e+00> : vector<16x768xf32>
    %36 = tpu.matmul %20, %35, %cst_18 {dimension_numbers = #tpu.dot_dimension_numbers<[1], [0], [0], [1], [0, 0, 1, 1], [], []>} : vector<16x128xf32>, vector<128x768xf32>, vector<16x768xf32> -> vector<16x768xf32>
    %c0_19 = arith.constant 0 : index
    %c0_20 = arith.constant 0 : index
    %37 = vector.load %arg6[%c0_19, %c0_20] : memref<128x384xf32, #tpu.memory_space<vmem>>, vector<128x384xf32>
    %cst_21 = arith.constant dense<0.000000e+00> : vector<16x384xf32>
    %38 = tpu.matmul %34, %37, %cst_21 {dimension_numbers = #tpu.dot_dimension_numbers<[1], [0], [0], [1], [0, 0, 1, 1], [], []>} : vector<16x128xf32>, vector<128x384xf32>, vector<16x384xf32> -> vector<16x384xf32>
    %39 = vector.broadcast %1 : vector<16x1xf32> to vector<16x384xf32>
    %40 = arith.mulf %38, %39 : vector<16x384xf32>
    %41 = vector.extract_strided_slice %36 {offsets = [0, 0], sizes = [16, 384], strides = [1, 1]} : vector<16x768xf32> to vector<16x384xf32>
    %42 = vector.extract_strided_slice %36 {offsets = [0, 384], sizes = [16, 384], strides = [1, 1]} : vector<16x768xf32> to vector<16x384xf32>
    %cst_22 = arith.constant 0.000000e+00 : f32
    %43 = vector.broadcast %cst_22 : f32 to vector<16x384xf32>
    %44 = arith.subf %43, %40 : vector<16x384xf32>
    %45 = math.exp %44 : vector<16x384xf32>
    %46 = arith.mulf %42, %45 : vector<16x384xf32>
    %47 = arith.addf %41, %46 : vector<16x384xf32>
    %48 = math.tanh %47 : vector<16x384xf32>
    %c0_23 = arith.constant 0 : index
    %c0_24 = arith.constant 0 : index
    %49 = vector.load %arg7[%c0_23, %c0_24] : memref<384x128xf32, #tpu.memory_space<vmem>>, vector<384x128xf32>
    %cst_25 = arith.constant dense<0.000000e+00> : vector<16x128xf32>
    %50 = tpu.matmul %48, %49, %cst_25 {dimension_numbers = #tpu.dot_dimension_numbers<[1], [0], [0], [1], [0, 0, 1, 1], [], []>} : vector<16x384xf32>, vector<384x128xf32>, vector<16x128xf32> -> vector<16x128xf32>
    %c0_26 = arith.constant 0 : index
    %c0_27 = arith.constant 0 : index
    %51 = vector.load %arg8[%c0_26, %c0_27] : memref<1x128xf32, #tpu.memory_space<vmem>>, vector<1x128xf32>
    %52 = vector.broadcast %51 : vector<1x128xf32> to vector<16x128xf32>
    %53 = arith.addf %50, %52 : vector<16x128xf32>
    %cst_28 = arith.constant 1.000000e+00 : f32
    %54 = vector.broadcast %cst_28 : f32 to vector<16x128xf32>
    %55 = arith.mulf %54, %53 : vector<16x128xf32>
    %cst_29 = arith.constant 2.000000e+01 : f32
    %56 = vector.broadcast %cst_29 : f32 to vector<16x128xf32>
    %57 = arith.cmpf ogt, %55, %56 : vector<16x128xf32>
    %cst_30 = arith.constant 2.000000e+01 : f32
    %58 = vector.broadcast %cst_30 : f32 to vector<16x128xf32>
    %59 = arith.minimumf %55, %58 : vector<16x128xf32>
    %60 = math.exp %59 : vector<16x128xf32>
    %cst_31 = arith.constant 1.000000e+00 : f32
    %61 = vector.broadcast %cst_31 : f32 to vector<16x128xf32>
    %62 = arith.addf %61, %60 : vector<16x128xf32>
    %63 = math.log %62 : vector<16x128xf32>
    %cst_32 = arith.constant 1.000000e+00 : f32
    %64 = vector.broadcast %cst_32 : f32 to vector<16x128xf32>
    %65 = arith.mulf %63, %64 : vector<16x128xf32>
    %66 = arith.select %57, %53, %65 : vector<16x128xi1>, vector<16x128xf32>
    %c0_33 = arith.constant 0 : index
    %c0_34 = arith.constant 0 : index
    %67 = vector.load %arg9[%c0_33, %c0_34] : memref<128x128xf32, #tpu.memory_space<vmem>>, vector<128x128xf32>
    %cst_35 = arith.constant dense<0.000000e+00> : vector<16x128xf32>
    %68 = tpu.matmul %66, %67, %cst_35 {dimension_numbers = #tpu.dot_dimension_numbers<[1], [0], [0], [1], [0, 0, 1, 1], [], []>} : vector<16x128xf32>, vector<128x128xf32>, vector<16x128xf32> -> vector<16x128xf32>
    %69 = tpu.iota {dimensions = array<i32: 1>} : vector<16x128xi32>
    %c4_i32 = arith.constant 4 : i32
    %70 = vector.broadcast %c4_i32 : i32 to vector<16x128xi32>
    %71 = arith.cmpi slt, %69, %70 : vector<16x128xi32>
    %cst_36 = arith.constant 1.000000e+00 : f32
    %72 = vector.shape_cast %1 : vector<16x1xf32> to vector<16x1xf32>
    %73 = vector.broadcast %72 : vector<16x1xf32> to vector<16x128xf32>
    %74 = vector.broadcast %cst_36 : f32 to vector<16x128xf32>
    %75 = arith.select %71, %73, %74 : vector<16x128xi1>, vector<16x128xf32>
    %76 = arith.mulf %68, %75 : vector<16x128xf32>
    %c0_37 = arith.constant 0 : index
    %c0_38 = arith.constant 0 : index
    %77 = vector.load %arg10[%c0_37, %c0_38] : memref<16x128xf32, #tpu.memory_space<vmem>>, vector<16x128xf32>
    tpu.vector_store %arg10[%c0_37, %c0_38], %76 {strides = array<i32>} : memref<16x128xf32, #tpu.memory_space<vmem>>, vector<16x128xf32>,
    return
  }
  func.func @transform_0(%arg0: i32) -> (i32, i32) {
    %c0_i32 = arith.constant 0 : i32
    %c0_i32_0 = arith.constant 0 : i32
    return %arg0, %c0_i32 : i32, i32
  }
  func.func @transform_1(%arg0: i32) -> (i32, i32) {
    %c0_i32 = arith.constant 0 : i32
    %c0_i32_0 = arith.constant 0 : i32
    return %arg0, %c0_i32 : i32, i32
  }
  func.func @transform_2(%arg0: i32) -> (i32, i32) {
    %c0_i32 = arith.constant 0 : i32
    %c0_i32_0 = arith.constant 0 : i32
    %c0_i32_1 = arith.constant 0 : i32
    return %c0_i32, %c0_i32_0 : i32, i32
  }
  func.func @transform_3(%arg0: i32) -> (i32, i32) {
    %c0_i32 = arith.constant 0 : i32
    %c0_i32_0 = arith.constant 0 : i32
    %c0_i32_1 = arith.constant 0 : i32
    return %c0_i32, %c0_i32_0 : i32, i32
  }
  func.func @transform_4(%arg0: i32) -> (i32, i32) {
    %c0_i32 = arith.constant 0 : i32
    %c0_i32_0 = arith.constant 0 : i32
    %c0_i32_1 = arith.constant 0 : i32
    return %c0_i32, %c0_i32_0 : i32, i32
  }
  func.func @transform_5(%arg0: i32) -> (i32, i32) {
    %c0_i32 = arith.constant 0 : i32
    %c0_i32_0 = arith.constant 0 : i32
    %c0_i32_1 = arith.constant 0 : i32
    return %c0_i32, %c0_i32_0 : i32, i32
  }
  func.func @transform_6(%arg0: i32) -> (i32, i32) {
    %c0_i32 = arith.constant 0 : i32
    %c0_i32_0 = arith.constant 0 : i32
    %c0_i32_1 = arith.constant 0 : i32
    return %c0_i32, %c0_i32_0 : i32, i32
  }
  func.func @transform_7(%arg0: i32) -> (i32, i32) {
    %c0_i32 = arith.constant 0 : i32
    %c0_i32_0 = arith.constant 0 : i32
    %c0_i32_1 = arith.constant 0 : i32
    return %c0_i32, %c0_i32_0 : i32, i32
  }
  func.func @transform_8(%arg0: i32) -> (i32, i32) {
    %c0_i32 = arith.constant 0 : i32
    %c0_i32_0 = arith.constant 0 : i32
    %c0_i32_1 = arith.constant 0 : i32
    return %c0_i32, %c0_i32_0 : i32, i32
  }
  func.func @transform_9(%arg0: i32) -> (i32, i32) {
    %c0_i32 = arith.constant 0 : i32
    %c0_i32_0 = arith.constant 0 : i32
    return %arg0, %c0_i32 : i32, i32
  }
}

</mosaic_0001>

<llo_original>
// kernel: sahp_forward.1
$region0: #{sahp_forward.1}
  #allocation0 [shape = 'u32[]', space=smem, size = 0x4, offset = 0x4, fixed_abs, tag = 'smem constant byte address 0x4 - core index']
  #allocation1 [shape = 'u32[144,128]{1,0:T(1,128)}', space=vmem, size = 0x12000, scoped, tag = 'internal scratch']
  %s0 = inlined_call_operand.vmem [shape: f32[16,32], index: 0, kind: input, shape index: {}]
  %s1 = inlined_call_operand.vmem [shape: f32[16,1], index: 1, kind: input, shape index: {}]
  %s2 = inlined_call_operand.vmem [shape: f32[32,256], index: 2, kind: input, shape index: {}]
  %s3 = inlined_call_operand.vmem [shape: f32[1,256], index: 3, kind: input, shape index: {}]
  %s4 = inlined_call_operand.vmem [shape: f32[128,768], index: 4, kind: input, shape index: {}]
  %s5 = inlined_call_operand.vmem [shape: f32[128,384], index: 5, kind: input, shape index: {}]
  %s6 = inlined_call_operand.vmem [shape: f32[384,128], index: 6, kind: input, shape index: {}]
  %s7 = inlined_call_operand.vmem [shape: f32[1,128], index: 7, kind: input, shape index: {}]
  %s8 = inlined_call_operand.vmem [shape: f32[128,128], index: 8, kind: input, shape index: {}]
  %s9 = inlined_call_operand.vmem [shape: f32[16,128], index: 9, kind: output, shape index: {}]
  %s10 = sld [smem:[#allocation0]]
  $region46: #{sahp_forward.1} parent=0
    _
  %s12 = ssub.s32 1, %s10
  %s13 = scalar_select 0, %s12, %s10
  // Predicated region
  $region2: #{sahp_forward.1} parent=0 // pred_check
    _
  $region3: #{sahp_forward.1} parent=0 // pred_check_branch
    %15 = sbr.rel (0) target = $region5
  $region4: #{sahp_forward.1} parent=0 // pred_region
    _
  $region5: #{sahp_forward.1} parent=0 // pred_fallthru
    _
  // Predicated region
  $region6: #{sahp_forward.1} parent=0 // pred_check
    _
  $region7: #{sahp_forward.1} parent=0 // pred_check_branch
    %17 = sbr.rel (0) target = $region9
  $region8: #{sahp_forward.1} parent=0 // pred_region
    _
  $region9: #{sahp_forward.1} parent=0 // pred_fallthru
    _
  // Predicated region
  $region10: #{sahp_forward.1} parent=0 // pred_check
    _
  $region11: #{sahp_forward.1} parent=0 // pred_check_branch
    %19 = sbr.rel (0) target = $region13
  $region12: #{sahp_forward.1} parent=0 // pred_region
    _
  $region13: #{sahp_forward.1} parent=0 // pred_fallthru
    _
  // Predicated region
  $region14: #{sahp_forward.1} parent=0 // pred_check
    _
  $region15: #{sahp_forward.1} parent=0 // pred_check_branch
    %21 = sbr.rel (0) target = $region17
  $region16: #{sahp_forward.1} parent=0 // pred_region
    _
  $region17: #{sahp_forward.1} parent=0 // pred_fallthru
    _
  // Predicated region
  $region18: #{sahp_forward.1} parent=0 // pred_check
    _
  $region19: #{sahp_forward.1} parent=0 // pred_check_branch
    %23 = sbr.rel (0) target = $region21
  $region20: #{sahp_forward.1} parent=0 // pred_region
    _
  $region21: #{sahp_forward.1} parent=0 // pred_fallthru
    _
  // Predicated region
  $region22: #{sahp_forward.1} parent=0 // pred_check
    _
  $region23: #{sahp_forward.1} parent=0 // pred_check_branch
    %25 = sbr.rel (0) target = $region25
  $region24: #{sahp_forward.1} parent=0 // pred_region
    _
  $region25: #{sahp_forward.1} parent=0 // pred_fallthru
    _
  // Predicated region
  $region26: #{sahp_forward.1} parent=0 // pred_check
    _
  $region27: #{sahp_forward.1} parent=0 // pred_check_branch
    %27 = sbr.rel (0) target = $region29
  $region28: #{sahp_forward.1} parent=0 // pred_region
    _
  $region29: #{sahp_forward.1} parent=0 // pred_fallthru
    _
  // Predicated region
  $region30: #{sahp_forward.1} parent=0 // pred_check
    _
  $region31: #{sahp_forward.1} parent=0 // pred_check_branch
    %29 = sbr.rel (0) target = $region33
  $region32: #{sahp_forward.1} parent=0 // pred_region
    _
  $region33: #{sahp_forward.1} parent=0 // pred_fallthru
    _
  // Predicated region
  $region34: #{sahp_forward.1} parent=0 // pred_check
    _
  $region35: #{sahp_forward.1} parent=0 // pred_check_branch
    %31 = sbr.rel (0) target = $region37
  $region36: #{sahp_forward.1} parent=0 // pred_region
    _
  $region37: #{sahp_forward.1} parent=0 // pred_fallthru
    _
  %v32 = vld [vmem:[%s0] sm:$0xff]
  %v33 = vld [vmem:[%s0 + $0x8] sm:$0xff]
  %v34 = vld [vmem:[%s1] sm:$0xff]
  %v35 = vld [vmem:[%s1 + $0x8] sm:$0xff]
  %v36 = vld [vmem:[%s2] sm:$0xff]
  %v37 = vld [vmem:[%s2 + $0x8] sm:$0xff]
  %v38 = vld [vmem:[%s2 + $0x10] sm:$0xff]
  %v39 = vld [vmem:[%s2 + $0x18] sm:$0xff]
  %v40 = vld [vmem:[%s2 + $0x20] sm:$0xff]
  %v41 = vld [vmem:[%s2 + $0x28] sm:$0xff]
  %v42 = vld [vmem:[%s2 + $0x30] sm:$0xff]
  %v43 = vld [vmem:[%s2 + $0x38] sm:$0xff]
  %v44 = vld [vmem:[%s3] sm:$0x3]
  %v46 = vlaneseq
  %v47 = vshrl.u32 %v46, 7
  %v48 = vsub.s32 0, %v47
  %v49 = vrot.slane %v44, %v48
  %v50 = vlaneseq
  %v51 = vshrl.u32 %v50, 7
  %v52 = vsub.s32 1, %v51
  %v53 = vrot.slane %v44, %v52
  %vm56 = vcmask 261120
  %v58 = vsel %vm56, %v32, 0
  %v61 = vsel %vm56, %v33, 0
  %63 = vmatprep.subr.mxu0 %v37
  %64 = vmatpush1.msra.mxu0 %v36
  %65 = vmatprep.subr.mxu0 %v39
  %66 = vmatpush1.msra.mxu0 %v38
  %67 = vmatprep.subr.mxu0 %v41
  %68 = vmatpush1.msra.mxu0 %v40
  %69 = vmatprep.subr.mxu0 %v43
  %70 = vmatpush1.msra.mxu0 %v42
  %71 = vmatprep.subr.mxu0 0.0
  %72 = vmatpush1.msra.mxu0 0.0
  %73 = vmatprep.subr.mxu0 0.0
  %74 = vmatpush1.msra.mxu0 0.0
  %75 = vmatprep.subr.mxu0 0.0
  %76 = vmatpush1.msra.mxu0 0.0
  %77 = vmatprep.subr.mxu0 0.0
  %78 = vmatpush1.msra.mxu0 0.0
  %79 = vmatprep.subr.mxu0 0.0
  %80 = vmatpush1.msra.mxu0 0.0
  %81 = vmatprep.subr.mxu0 0.0
  %82 = vmatpush1.msra.mxu0 0.0
  %83 = vmatprep.subr.mxu0 0.0
  %84 = vmatpush1.msra.mxu0 0.0
  %85 = vmatprep.subr.mxu0 0.0
  %86 = vmatpush1.msra.mxu0 0.0
  %87 = vmatprep.subr.mxu0 0.0
  %88 = vmatpush1.msra.mxu0 0.0
  %89 = vmatprep.subr.mxu0 0.0
  %90 = vmatpush1.msra.mxu0 0.0
  %91 = vmatprep.subr.mxu0 0.0
  %92 = vmatpush1.msra.mxu0 0.0
  %93 = vmatprep.subr.mxu0 0.0
  %94 = vmatpush1.msra.mxu0 0.0
  %95 = vmatprep.subr.mxu0 0.0
  %96 = vmatpush1.msra.mxu0 0.0
  %97 = vmatprep.subr.mxu0 0.0
  %98 = vmatpush1.msra.mxu0 0.0
  %99 = vmatprep.subr.mxu0 0.0
  %100 = vmatpush1.msra.mxu0 0.0
  %101 = vmatprep.subr.mxu0 0.0
  %102 = vmatpush1.msra.mxu0 0.0
  %103 = vmatprep.subr.mxu0 0.0
  %104 = vmatpush1.msra.mxu0 0.0
  %105 = vmatprep.subr.mxu0 0.0
  %106 = vmatpush1.msra.mxu0 0.0
  %107 = vmatprep.subr.mxu0 0.0
  %108 = vmatpush1.msra.mxu0 0.0
  %109 = vmatprep.subr.mxu0 0.0
  %110 = vmatpush1.msra.mxu0 0.0
  %111 = vmatprep.subr.mxu0 0.0
  %112 = vmatpush1.msra.mxu0 0.0
  %113 = vmatprep.subr.mxu0 0.0
  %114 = vmatpush1.msra.mxu0 0.0
  %115 = vmatprep.subr.mxu0 0.0
  %116 = vmatpush1.msra.mxu0 0.0
  %117 = vmatprep.subr.mxu0 0.0
  %118 = vmatpush1.msra.mxu0 0.0
  %119 = vmatprep.subr.mxu0 0.0
  %120 = vmatpush1.msra.mxu0 0.0
  %121 = vmatprep.subr.mxu0 0.0
  %122 = vmatpush1.msra.mxu0 0.0
  %123 = vmatprep.subr.mxu0 0.0
  %124 = vmatpush1.msra.mxu0 0.0
  %125 = vmatprep.subr.mxu0 0.0
  %126 = vmatpush1.msra.mxu0 0.0
  %127 = vmatprep.mubr.f32.mxu0 0.0
  %128 = vmatmul.mubr.f32.gmra.mrb[0].mxu0 %v58
  %v129 = vpop.f32.mrb[0].mxu0
  %v130 = vadd.f32 %v49, %v129
  %v131 = vpop.f32.mrb[0].mxu0
  %v132 = vadd.f32 %v53, %v131
  %133 = vmatprep.mubr.f32.mxu0 0.0
  %134 = vmatmul.mubr.f32.gmra.mrb[0].mxu0 %v61
  %v135 = vpop.f32.mrb[0].mxu0
  %v136 = vadd.f32 %v49, %v135
  %v137 = vpop.f32.mrb[0].mxu0
  %v138 = vadd.f32 %v53, %v137
  %139 = vdwg.mxu0
  %v140 = vmul.f32 %v130, 0.5
  %v141 = vmul.f32 %v136, 0.5
  %v142 = vmul.f32 %v130, 0.044715
  %v143 = vmul.f32 %v136, 0.044715
  %v144 = vmul.f32 %v142, %v130
  %v145 = vmul.f32 %v143, %v136
  %v146 = vmul.f32 %v144, %v130
  %v147 = vmul.f32 %v145, %v136
  %v148 = vadd.f32 %v130, %v146
  %v149 = vadd.f32 %v136, %v147
  %v150 = vmul.f32 %v148, 0.7978846
  %v151 = vmul.f32 %v149, 0.7978846
  %v152 = vtanh.pop %v150
  %v153 = vtanh.pop %v151
  %v154 = vadd.f32 %v152, 1.0
  %v155 = vadd.f32 %v153, 1.0
  %v156 = vmul.f32 %v140, %v154
  %v157 = vmul.f32 %v141, %v155
  %v158 = vmul.f32 %v132, 10.0
  %v159 = vmul.f32 %v138, 10.0
  %vm160 = vcmp.gt.f32.partialorder %v158, 20.0
  %vm161 = vcmp.gt.f32.partialorder %v159, 20.0
  %v162 = vmin.f32 %v158, 20.0
  %v163 = vmin.f32 %v159, 20.0
  %v164 = vmul.f32 %v162, 1.442695
  %v165 = vpow.pop %v164
  %v166 = vmul.f32 %v163, 1.442695
  %v167 = vpow.pop %v166
  %v168 = vadd.f32 %v165, 1.0
  %v169 = vadd.f32 %v167, 1.0
  %v170 = vlog2.pop %v168
  %v171 = vmul.f32 %v170, 0.6931472
  %v172 = vlog2.pop %v169
  %v173 = vmul.f32 %v172, 0.6931472
  %v174 = vmul.f32 %v171, 0.1
  %v175 = vmul.f32 %v173, 0.1
  %v176 = vsel %vm160, %v132, %v174
  %v177 = vsel %vm161, %v138, %v175
  %v178 = vld [vmem:[%s4] sm:$0xff]
  %v179 = vld [vmem:[%s4 + $0x8] sm:$0xff]
  %v180 = vld [vmem:[%s4 + $0x10] sm:$0xff]
  %v181 = vld [vmem:[%s4 + $0x18] sm:$0xff]
  %v182 = vld [vmem:[%s4 + $0x20] sm:$0xff]
  %v183 = vld [vmem:[%s4 + $0x28] sm:$0xff]
  %v184 = vld [vmem:[%s4 + $0x30] sm:$0xff]
  %v185 = vld [vmem:[%s4 + $0x38] sm:$0xff]
  %v186 = vld [vmem:[%s4 + $0x40] sm:$0xff]
  %v187 = vld [vmem:[%s4 + $0x48] sm:$0xff]
  %v188 = vld [vmem:[%s4 + $0x50] sm:$0xff]
  %v189 = vld [vmem:[%s4 + $0x58] sm:$0xff]
  %v190 = vld [vmem:[%s4 + $0x60] sm:$0xff]
  %v191 = vld [vmem:[%s4 + $0x68] sm:$0xff]
  %v192 = vld [vmem:[%s4 + $0x70] sm:$0xff]
  %v193 = vld [vmem:[%s4 + $0x78] sm:$0xff]
  %v194 = vld [vmem:[%s4 + $0x80] sm:$0xff]
  %v195 = vld [vmem:[%s4 + $0x88] sm:$0xff]
  %v196 = vld [vmem:[%s4 + $0x90] sm:$0xff]
  %v197 = vld [vmem:[%s4 + $0x98] sm:$0xff]
  %v198 = vld [vmem:[%s4 + $0xa0] sm:$0xff]
  %v199 = vld [vmem:[%s4 + $0xa8] sm:$0xff]
  %v200 = vld [vmem:[%s4 + $0xb0] sm:$0xff]
  %v201 = vld [vmem:[%s4 + $0xb8] sm:$0xff]
  %v202 = vld [vmem:[%s4 + $0xc0] sm:$0xff]
  %v203 = vld [vmem:[%s4 + $0xc8] sm:$0xff]
  %v204 = vld [vmem:[%s4 + $0xd0] sm:$0xff]
  %v205 = vld [vmem:[%s4 + $0xd8] sm:$0xff]
  %v206 = vld [vmem:[%s4 + $0xe0] sm:$0xff]
  %v207 = vld [vmem:[%s4 + $0xe8] sm:$0xff]
  %v208 = vld [vmem:[%s4 + $0xf0] sm:$0xff]
  %v209 = vld [vmem:[%s4 + $0xf8] sm:$0xff]
  %v210 = vld [vmem:[%s4 + $0x100] sm:$0xff]
  %v211 = vld [vmem:[%s4 + $0x108] sm:$0xff]
  %v212 = vld [vmem:[%s4 + $0x110] sm:$0xff]
  %v213 = vld [vmem:[%s4 + $0x118] sm:$0xff]
  %v214 = vld [vmem:[%s4 + $0x120] sm:$0xff]
  %v215 = vld [vmem:[%s4 + $0x128] sm:$0xff]
  %v216 = vld [vmem:[%s4 + $0x130] sm:$0xff]
  %v217 = vld [vmem:[%s4 + $0x138] sm:$0xff]
  %v218 = vld [vmem:[%s4 + $0x140] sm:$0xff]
  %v219 = vld [vmem:[%s4 + $0x148] sm:$0xff]
  %v220 = vld [vmem:[%s4 + $0x150] sm:$0xff]
  %v221 = vld [vmem:[%s4 + $0x158] sm:$0xff]
  %v222 = vld [vmem:[%s4 + $0x160] sm:$0xff]
  %v223 = vld [vmem:[%s4 + $0x168] sm:$0xff]
  %v224 = vld [vmem:[%s4 + $0x170] sm:$0xff]
  %v225 = vld [vmem:[%s4 + $0x178] sm:$0xff]
  %v226 = vld [vmem:[%s4 + $0x180] sm:$0xff]
  %v227 = vld [vmem:[%s4 + $0x188] sm:$0xff]
  %v228 = vld [vmem:[%s4 + $0x190] sm:$0xff]
  %v229 = vld [vmem:[%s4 + $0x198] sm:$0xff]
  %v230 = vld [vmem:[%s4 + $0x1a0] sm:$0xff]
  %v231 = vld [vmem:[%s4 + $0x1a8] sm:$0xff]
  %v232 = vld [vmem:[%s4 + $0x1b0] sm:$0xff]
  %v233 = vld [vmem:[%s4 + $0x1b8] sm:$0xff]
  %v234 = vld [vmem:[%s4 + $0x1c0] sm:$0xff]
  %v235 = vld [vmem:[%s4 + $0x1c8] sm:$0xff]
  %v236 = vld [vmem:[%s4 + $0x1d0] sm:$0xff]
  %v237 = vld [vmem:[%s4 + $0x1d8] sm:$0xff]
  %v238 = vld [vmem:[%s4 + $0x1e0] sm:$0xff]
  %v239 = vld [vmem:[%s4 + $0x1e8] sm:$0xff]
  %v240 = vld [vmem:[%s4 + $0x1f0] sm:$0xff]
  %v241 = vld [vmem:[%s4 + $0x1f8] sm:$0xff]
  %v242 = vld [vmem:[%s4 + $0x200] sm:$0xff]
  %v243 = vld [vmem:[%s4 + $0x208] sm:$0xff]
  %v244 = vld [vmem:[%s4 + $0x210] sm:$0xff]
  %v245 = vld [vmem:[%s4 + $0x218] sm:$0xff]
  %v246 = vld [vmem:[%s4 + $0x220] sm:$0xff]
  %v247 = vld [vmem:[%s4 + $0x228] sm:$0xff]
  %v248 = vld [vmem:[%s4 + $0x230] sm:$0xff]
  %v249 = vld [vmem:[%s4 + $0x238] sm:$0xff]
  %v250 = vld [vmem:[%s4 + $0x240] sm:$0xff]
  %v251 = vld [vmem:[%s4 + $0x248] sm:$0xff]
  %v252 = vld [vmem:[%s4 + $0x250] sm:$0xff]
  %v253 = vld [vmem:[%s4 + $0x258] sm:$0xff]
  %v254 = vld [vmem:[%s4 + $0x260] sm:$0xff]
  %v255 = vld [vmem:[%s4 + $0x268] sm:$0xff]
  %v256 = vld [vmem:[%s4 + $0x270] sm:$0xff]
  %v257 = vld [vmem:[%s4 + $0x278] sm:$0xff]
  %v258 = vld [vmem:[%s4 + $0x280] sm:$0xff]
  %v259 = vld [vmem:[%s4 + $0x288] sm:$0xff]
  %v260 = vld [vmem:[%s4 + $0x290] sm:$0xff]
  %v261 = vld [vmem:[%s4 + $0x298] sm:$0xff]
  %v262 = vld [vmem:[%s4 + $0x2a0] sm:$0xff]
  %v263 = vld [vmem:[%s4 + $0x2a8] sm:$0xff]
  %v264 = vld [vmem:[%s4 + $0x2b0] sm:$0xff]
  %v265 = vld [vmem:[%s4 + $0x2b8] sm:$0xff]
  %v266 = vld [vmem:[%s4 + $0x2c0] sm:$0xff]
  %v267 = vld [vmem:[%s4 + $0x2c8] sm:$0xff]
  %v268 = vld [vmem:[%s4 + $0x2d0] sm:$0xff]
  %v269 = vld [vmem:[%s4 + $0x2d8] sm:$0xff]
  %v270 = vld [vmem:[%s4 + $0x2e0] sm:$0xff]
  %v271 = vld [vmem:[%s4 + $0x2e8] sm:$0xff]
  %v272 = vld [vmem:[%s4 + $0x2f0] sm:$0xff]
  %v273 = vld [vmem:[%s4 + $0x2f8] sm:$0xff]
  %274 = vmatprep.subr.mxu0 %v179
  %275 = vmatpush1.msra.mxu0 %v178
  %276 = vmatprep.subr.mxu0 %v185
  %277 = vmatpush1.msra.mxu0 %v184
  %278 = vmatprep.subr.mxu0 %v191
  %279 = vmatpush1.msra.mxu0 %v190
  %280 = vmatprep.subr.mxu0 %v197
  %281 = vmatpush1.msra.mxu0 %v196
  %282 = vmatprep.subr.mxu0 %v203
  %283 = vmatpush1.msra.mxu0 %v202
  %284 = vmatprep.subr.mxu0 %v209
  %285 = vmatpush1.msra.mxu0 %v208
  %286 = vmatprep.subr.mxu0 %v215
  %287 = vmatpush1.msra.mxu0 %v214
  %288 = vmatprep.subr.mxu0 %v221
  %289 = vmatpush1.msra.mxu0 %v220
  %290 = vmatprep.subr.mxu0 %v227
  %291 = vmatpush1.msra.mxu0 %v226
  %292 = vmatprep.subr.mxu0 %v233
  %293 = vmatpush1.msra.mxu0 %v232
  %294 = vmatprep.subr.mxu0 %v239
  %295 = vmatpush1.msra.mxu0 %v238
  %296 = vmatprep.subr.mxu0 %v245
  %297 = vmatpush1.msra.mxu0 %v244
  %298 = vmatprep.subr.mxu0 %v251
  %299 = vmatpush1.msra.mxu0 %v250
  %300 = vmatprep.subr.mxu0 %v257
  %301 = vmatpush1.msra.mxu0 %v256
  %302 = vmatprep.subr.mxu0 %v263
  %303 = vmatpush1.msra.mxu0 %v262
  %304 = vmatprep.subr.mxu0 %v269
  %305 = vmatpush1.msra.mxu0 %v268
  %306 = vmatprep.subr.mxu0 0.0
  %307 = vmatpush1.msra.mxu0 0.0
  %308 = vmatprep.subr.mxu0 0.0
  %309 = vmatpush1.msra.mxu0 0.0
  %310 = vmatprep.subr.mxu0 0.0
  %311 = vmatpush1.msra.mxu0 0.0
  %312 = vmatprep.subr.mxu0 0.0
  %313 = vmatpush1.msra.mxu0 0.0
  %314 = vmatprep.subr.mxu0 0.0
  %315 = vmatpush1.msra.mxu0 0.0
  %316 = vmatprep.subr.mxu0 0.0
  %317 = vmatpush1.msra.mxu0 0.0
  %318 = vmatprep.subr.mxu0 0.0
  %319 = vmatpush1.msra.mxu0 0.0
  %320 = vmatprep.subr.mxu0 0.0
  %321 = vmatpush1.msra.mxu0 0.0
  %322 = vmatprep.subr.mxu0 0.0
  %323 = vmatpush1.msra.mxu0 0.0
  %324 = vmatprep.subr.mxu0 0.0
  %325 = vmatpush1.msra.mxu0 0.0
  %326 = vmatprep.subr.mxu0 0.0
  %327 = vmatpush1.msra.mxu0 0.0
  %328 = vmatprep.subr.mxu0 0.0
  %329 = vmatpush1.msra.mxu0 0.0
  %330 = vmatprep.subr.mxu0 0.0
  %331 = vmatpush1.msra.mxu0 0.0
  %332 = vmatprep.subr.mxu0 0.0
  %333 = vmatpush1.msra.mxu0 0.0
  %334 = vmatprep.subr.mxu0 0.0
  %335 = vmatpush1.msra.mxu0 0.0
  %336 = vmatprep.subr.mxu0 0.0
  %337 = vmatpush1.msra.mxu0 0.0
  %338 = vmatprep.mubr.f32.mxu0 0.0
  %339 = vmatmul.mubr.f32.gmra.mrb[0].mxu0 %v156
  %v340 = vpop.f32.mrb[0].mxu0
  %v341 = vadd.f32 0.0, %v340
  %v342 = vpop.f32.mrb[0].mxu0
  %v343 = vadd.f32 0.0, %v342
  %344 = vmatprep.mubr.f32.mxu0 0.0
  %345 = vmatmul.mubr.f32.gmra.mrb[0].mxu0 %v157
  %v346 = vpop.f32.mrb[0].mxu0
  %v347 = vadd.f32 0.0, %v346
  %v348 = vpop.f32.mrb[0].mxu0
  %v349 = vadd.f32 0.0, %v348
  %350 = vdwg.mxu0
  %351 = vmatprep.subr.mxu0 %v181
  %352 = vmatpush1.msra.mxu0 %v180
  %353 = vmatprep.subr.mxu0 %v187
  %354 = vmatpush1.msra.mxu0 %v186
  %355 = vmatprep.subr.mxu0 %v193
  %356 = vmatpush1.msra.mxu0 %v192
  %357 = vmatprep.subr.mxu0 %v199
  %358 = vmatpush1.msra.mxu0 %v198
  %359 = vmatprep.subr.mxu0 %v205
  %360 = vmatpush1.msra.mxu0 %v204
  %361 = vmatprep.subr.mxu0 %v211
  %362 = vmatpush1.msra.mxu0 %v210
  %363 = vmatprep.subr.mxu0 %v217
  %364 = vmatpush1.msra.mxu0 %v216
  %365 = vmatprep.subr.mxu0 %v223
  %366 = vmatpush1.msra.mxu0 %v222
  %367 = vmatprep.subr.mxu0 %v229
  %368 = vmatpush1.msra.mxu0 %v228
  %369 = vmatprep.subr.mxu0 %v235
  %370 = vmatpush1.msra.mxu0 %v234
  %371 = vmatprep.subr.mxu0 %v241
  %372 = vmatpush1.msra.mxu0 %v240
  %373 = vmatprep.subr.mxu0 %v247
  %374 = vmatpush1.msra.mxu0 %v246
  %375 = vmatprep.subr.mxu0 %v253
  %376 = vmatpush1.msra.mxu0 %v252
  %377 = vmatprep.subr.mxu0 %v259
  %378 = vmatpush1.msra.mxu0 %v258
  %379 = vmatprep.subr.mxu0 %v265
  %380 = vmatpush1.msra.mxu0 %v264
  %381 = vmatprep.subr.mxu0 %v271
  %382 = vmatpush1.msra.mxu0 %v270
  %383 = vmatprep.subr.mxu0 0.0
  %384 = vmatpush1.msra.mxu0 0.0
  %385 = vmatprep.subr.mxu0 0.0
  %386 = vmatpush1.msra.mxu0 0.0
  %387 = vmatprep.subr.mxu0 0.0
  %388 = vmatpush1.msra.mxu0 0.0
  %389 = vmatprep.subr.mxu0 0.0
  %390 = vmatpush1.msra.mxu0 0.0
  %391 = vmatprep.subr.mxu0 0.0
  %392 = vmatpush1.msra.mxu0 0.0
  %393 = vmatprep.subr.mxu0 0.0
  %394 = vmatpush1.msra.mxu0 0.0
  %395 = vmatprep.subr.mxu0 0.0
  %396 = vmatpush1.msra.mxu0 0.0
  %397 = vmatprep.subr.mxu0 0.0
  %398 = vmatpush1.msra.mxu0 0.0
  %399 = vmatprep.subr.mxu0 0.0
  %400 = vmatpush1.msra.mxu0 0.0
  %401 = vmatprep.subr.mxu0 0.0
  %402 = vmatpush1.msra.mxu0 0.0
  %403 = vmatprep.subr.mxu0 0.0
  %404 = vmatpush1.msra.mxu0 0.0
  %405 = vmatprep.subr.mxu0 0.0
  %406 = vmatpush1.msra.mxu0 0.0
  %407 = vmatprep.subr.mxu0 0.0
  %408 = vmatpush1.msra.mxu0 0.0
  %409 = vmatprep.subr.mxu0 0.0
  %410 = vmatpush1.msra.mxu0 0.0
  %411 = vmatprep.subr.mxu0 0.0
  %412 = vmatpush1.msra.mxu0 0.0
  %413 = vmatprep.subr.mxu0 0.0
  %414 = vmatpush1.msra.mxu0 0.0
  %415 = vmatprep.mubr.f32.mxu0 0.0
  %416 = vmatmul.mubr.f32.gmra.mrb[0].mxu0 %v156
  %v417 = vpop.f32.mrb[0].mxu0
  %v418 = vadd.f32 0.0, %v417
  %v419 = vpop.f32.mrb[0].mxu0
  %v420 = vadd.f32 0.0, %v419
  %421 = vmatprep.mubr.f32.mxu0 0.0
  %422 = vmatmul.mubr.f32.gmra.mrb[0].mxu0 %v157
  %v423 = vpop.f32.mrb[0].mxu0
  %v424 = vadd.f32 0.0, %v423
  %v425 = vpop.f32.mrb[0].mxu0
  %v426 = vadd.f32 0.0, %v425
  %427 = vdwg.mxu0
  %428 = vmatprep.subr.mxu0 %v183
  %429 = vmatpush1.msra.mxu0 %v182
  %430 = vmatprep.subr.mxu0 %v189
  %431 = vmatpush1.msra.mxu0 %v188
  %432 = vmatprep.subr.mxu0 %v195
  %433 = vmatpush1.msra.mxu0 %v194
  %434 = vmatprep.subr.mxu0 %v201
  %435 = vmatpush1.msra.mxu0 %v200
  %436 = vmatprep.subr.mxu0 %v207
  %437 = vmatpush1.msra.mxu0 %v206
  %438 = vmatprep.subr.mxu0 %v213
  %439 = vmatpush1.msra.mxu0 %v212
  %440 = vmatprep.subr.mxu0 %v219
  %441 = vmatpush1.msra.mxu0 %v218
  %442 = vmatprep.subr.mxu0 %v225
  %443 = vmatpush1.msra.mxu0 %v224
  %444 = vmatprep.subr.mxu0 %v231
  %445 = vmatpush1.msra.mxu0 %v230
  %446 = vmatprep.subr.mxu0 %v237
  %447 = vmatpush1.msra.mxu0 %v236
  %448 = vmatprep.subr.mxu0 %v243
  %449 = vmatpush1.msra.mxu0 %v242
  %450 = vmatprep.subr.mxu0 %v249
  %451 = vmatpush1.msra.mxu0 %v248
  %452 = vmatprep.subr.mxu0 %v255
  %453 = vmatpush1.msra.mxu0 %v254
  %454 = vmatprep.subr.mxu0 %v261
  %455 = vmatpush1.msra.mxu0 %v260
  %456 = vmatprep.subr.mxu0 %v267
  %457 = vmatpush1.msra.mxu0 %v266
  %458 = vmatprep.subr.mxu0 %v273
  %459 = vmatpush1.msra.mxu0 %v272
  %460 = vmatprep.subr.mxu0 0.0
  %461 = vmatpush1.msra.mxu0 0.0
  %462 = vmatprep.subr.mxu0 0.0
  %463 = vmatpush1.msra.mxu0 0.0
  %464 = vmatprep.subr.mxu0 0.0
  %465 = vmatpush1.msra.mxu0 0.0
  %466 = vmatprep.subr.mxu0 0.0
  %467 = vmatpush1.msra.mxu0 0.0
  %468 = vmatprep.subr.mxu0 0.0
  %469 = vmatpush1.msra.mxu0 0.0
  %470 = vmatprep.subr.mxu0 0.0
  %471 = vmatpush1.msra.mxu0 0.0
  %472 = vmatprep.subr.mxu0 0.0
  %473 = vmatpush1.msra.mxu0 0.0
  %474 = vmatprep.subr.mxu0 0.0
  %475 = vmatpush1.msra.mxu0 0.0
  %476 = vmatprep.subr.mxu0 0.0
  %477 = vmatpush1.msra.mxu0 0.0
  %478 = vmatprep.subr.mxu0 0.0
  %479 = vmatpush1.msra.mxu0 0.0
  %480 = vmatprep.subr.mxu0 0.0
  %481 = vmatpush1.msra.mxu0 0.0
  %482 = vmatprep.subr.mxu0 0.0
  %483 = vmatpush1.msra.mxu0 0.0
  %484 = vmatprep.subr.mxu0 0.0
  %485 = vmatpush1.msra.mxu0 0.0
  %486 = vmatprep.subr.mxu0 0.0
  %487 = vmatpush1.msra.mxu0 0.0
  %488 = vmatprep.subr.mxu0 0.0
  %489 = vmatpush1.msra.mxu0 0.0
  %490 = vmatprep.subr.mxu0 0.0
  %491 = vmatpush1.msra.mxu0 0.0
  %492 = vmatprep.mubr.f32.mxu0 0.0
  %493 = vmatmul.mubr.f32.gmra.mrb[0].mxu0 %v156
  %v494 = vpop.f32.mrb[0].mxu0
  %v495 = vadd.f32 0.0, %v494
  %v496 = vpop.f32.mrb[0].mxu0
  %v497 = vadd.f32 0.0, %v496
  %498 = vmatprep.mubr.f32.mxu0 0.0
  %499 = vmatmul.mubr.f32.gmra.mrb[0].mxu0 %v157
  %v500 = vpop.f32.mrb[0].mxu0
  %v501 = vadd.f32 0.0, %v500
  %v502 = vpop.f32.mrb[0].mxu0
  %v503 = vadd.f32 0.0, %v502
  %504 = vdwg.mxu0
  %v505 = vld [vmem:[%s5] sm:$0xff]
  %v506 = vld [vmem:[%s5 + $0x8] sm:$0xff]
  %v507 = vld [vmem:[%s5 + $0x10] sm:$0xff]
  %v508 = vld [vmem:[%s5 + $0x18] sm:$0xff]
  %v509 = vld [vmem:[%s5 + $0x20] sm:$0xff]
  %v510 = vld [vmem:[%s5 + $0x28] sm:$0xff]
  %v511 = vld [vmem:[%s5 + $0x30] sm:$0xff]
  %v512 = vld [vmem:[%s5 + $0x38] sm:$0xff]
  %v513 = vld [vmem:[%s5 + $0x40] sm:$0xff]
  %v514 = vld [vmem:[%s5 + $0x48] sm:$0xff]
  %v515 = vld [vmem:[%s5 + $0x50] sm:$0xff]
  %v516 = vld [vmem:[%s5 + $0x58] sm:$0xff]
  %v517 = vld [vmem:[%s5 + $0x60] sm:$0xff]
  %v518 = vld [vmem:[%s5 + $0x68] sm:$0xff]
  %v519 = vld [vmem:[%s5 + $0x70] sm:$0xff]
  %v520 = vld [vmem:[%s5 + $0x78] sm:$0xff]
  %v521 = vld [vmem:[%s5 + $0x80] sm:$0xff]
  %v522 = vld [vmem:[%s5 + $0x88] sm:$0xff]
  %v523 = vld [vmem:[%s5 + $0x90] sm:$0xff]
  %v524 = vld [vmem:[%s5 + $0x98] sm:$0xff]
  %v525 = vld [vmem:[%s5 + $0xa0] sm:$0xff]
  %v526 = vld [vmem:[%s5 + $0xa8] sm:$0xff]
  %v527 = vld [vmem:[%s5 + $0xb0] sm:$0xff]
  %v528 = vld [vmem:[%s5 + $0xb8] sm:$0xff]
  %v529 = vld [vmem:[%s5 + $0xc0] sm:$0xff]
  %v530 = vld [vmem:[%s5 + $0xc8] sm:$0xff]
  %v531 = vld [vmem:[%s5 + $0xd0] sm:$0xff]
  %v532 = vld [vmem:[%s5 + $0xd8] sm:$0xff]
  %v533 = vld [vmem:[%s5 + $0xe0] sm:$0xff]
  %v534 = vld [vmem:[%s5 + $0xe8] sm:$0xff]
  %v535 = vld [vmem:[%s5 + $0xf0] sm:$0xff]
  %v536 = vld [vmem:[%s5 + $0xf8] sm:$0xff]
  %v537 = vld [vmem:[%s5 + $0x100] sm:$0xff]
  %v538 = vld [vmem:[%s5 + $0x108] sm:$0xff]
  %v539 = vld [vmem:[%s5 + $0x110] sm:$0xff]
  %v540 = vld [vmem:[%s5 + $0x118] sm:$0xff]
  %v541 = vld [vmem:[%s5 + $0x120] sm:$0xff]
  %v542 = vld [vmem:[%s5 + $0x128] sm:$0xff]
  %v543 = vld [vmem:[%s5 + $0x130] sm:$0xff]
  %v544 = vld [vmem:[%s5 + $0x138] sm:$0xff]
  %v545 = vld [vmem:[%s5 + $0x140] sm:$0xff]
  %v546 = vld [vmem:[%s5 + $0x148] sm:$0xff]
  %v547 = vld [vmem:[%s5 + $0x150] sm:$0xff]
  %v548 = vld [vmem:[%s5 + $0x158] sm:$0xff]
  %v549 = vld [vmem:[%s5 + $0x160] sm:$0xff]
  %v550 = vld [vmem:[%s5 + $0x168] sm:$0xff]
  %v551 = vld [vmem:[%s5 + $0x170] sm:$0xff]
  %v552 = vld [vmem:[%s5 + $0x178] sm:$0xff]
  %553 = vmatprep.subr.mxu0 %v506
  %554 = vmatpush1.msra.mxu0 %v505
  %555 = vmatprep.subr.mxu0 %v509
  %556 = vmatpush1.msra.mxu0 %v508
  %557 = vmatprep.subr.mxu0 %v512
  %558 = vmatpush1.msra.mxu0 %v511
  %559 = vmatprep.subr.mxu0 %v515
  %560 = vmatpush1.msra.mxu0 %v514
  %561 = vmatprep.subr.mxu0 %v518
  %562 = vmatpush1.msra.mxu0 %v517
  %563 = vmatprep.subr.mxu0 %v521
  %564 = vmatpush1.msra.mxu0 %v520
  %565 = vmatprep.subr.mxu0 %v524
  %566 = vmatpush1.msra.mxu0 %v523
  %567 = vmatprep.subr.mxu0 %v527
  %568 = vmatpush1.msra.mxu0 %v526
  %569 = vmatprep.subr.mxu0 %v530
  %570 = vmatpush1.msra.mxu0 %v529
  %571 = vmatprep.subr.mxu0 %v533
  %572 = vmatpush1.msra.mxu0 %v532
  %573 = vmatprep.subr.mxu0 %v536
  %574 = vmatpush1.msra.mxu0 %v535
  %575 = vmatprep.subr.mxu0 %v539
  %576 = vmatpush1.msra.mxu0 %v538
  %577 = vmatprep.subr.mxu0 %v542
  %578 = vmatpush1.msra.mxu0 %v541
  %579 = vmatprep.subr.mxu0 %v545
  %580 = vmatpush1.msra.mxu0 %v544
  %581 = vmatprep.subr.mxu0 %v548
  %582 = vmatpush1.msra.mxu0 %v547
  %583 = vmatprep.subr.mxu0 %v551
  %584 = vmatpush1.msra.mxu0 %v550
  %585 = vmatprep.subr.mxu0 0.0
  %586 = vmatpush1.msra.mxu0 0.0
  %587 = vmatprep.subr.mxu0 0.0
  %588 = vmatpush1.msra.mxu0 0.0
  %589 = vmatprep.subr.mxu0 0.0
  %590 = vmatpush1.msra.mxu0 0.0
  %591 = vmatprep.subr.mxu0 0.0
  %592 = vmatpush1.msra.mxu0 0.0
  %593 = vmatprep.subr.mxu0 0.0
  %594 = vmatpush1.msra.mxu0 0.0
  %595 = vmatprep.subr.mxu0 0.0
  %596 = vmatpush1.msra.mxu0 0.0
  %597 = vmatprep.subr.mxu0 0.0
  %598 = vmatpush1.msra.mxu0 0.0
  %599 = vmatprep.subr.mxu0 0.0
  %600 = vmatpush1.msra.mxu0 0.0
  %601 = vmatprep.subr.mxu0 0.0
  %602 = vmatpush1.msra.mxu0 0.0
  %603 = vmatprep.subr.mxu0 0.0
  %604 = vmatpush1.msra.mxu0 0.0
  %605 = vmatprep.subr.mxu0 0.0
  %606 = vmatpush1.msra.mxu0 0.0
  %607 = vmatprep.subr.mxu0 0.0
  %608 = vmatpush1.msra.mxu0 0.0
  %609 = vmatprep.subr.mxu0 0.0
  %610 = vmatpush1.msra.mxu0 0.0
  %611 = vmatprep.subr.mxu0 0.0
  %612 = vmatpush1.msra.mxu0 0.0
  %613 = vmatprep.subr.mxu0 0.0
  %614 = vmatpush1.msra.mxu0 0.0
  %615 = vmatprep.subr.mxu0 0.0
  %616 = vmatpush1.msra.mxu0 0.0
  %617 = vmatprep.mubr.f32.mxu0 0.0
  %618 = vmatmul.mubr.f32.gmra.mrb[0].mxu0 %v176
  %v619 = vpop.f32.mrb[0].mxu0
  %v620 = vadd.f32 0.0, %v619
  %v621 = vpop.f32.mrb[0].mxu0
  %v622 = vadd.f32 0.0, %v621
  %623 = vmatprep.mubr.f32.mxu0 0.0
  %624 = vmatmul.mubr.f32.gmra.mrb[0].mxu0 %v177
  %v625 = vpop.f32.mrb[0].mxu0
  %v626 = vadd.f32 0.0, %v625
  %v627 = vpop.f32.mrb[0].mxu0
  %v628 = vadd.f32 0.0, %v627
  %629 = vdwg.mxu0
  %630 = vmatprep.subr.mxu0 0.0
  %631 = vmatpush1.msra.mxu0 %v507
  %632 = vmatprep.subr.mxu0 0.0
  %633 = vmatpush1.msra.mxu0 %v510
  %634 = vmatprep.subr.mxu0 0.0
  %635 = vmatpush1.msra.mxu0 %v513
  %636 = vmatprep.subr.mxu0 0.0
  %637 = vmatpush1.msra.mxu0 %v516
  %638 = vmatprep.subr.mxu0 0.0
  %639 = vmatpush1.msra.mxu0 %v519
  %640 = vmatprep.subr.mxu0 0.0
  %641 = vmatpush1.msra.mxu0 %v522
  %642 = vmatprep.subr.mxu0 0.0
  %643 = vmatpush1.msra.mxu0 %v525
  %644 = vmatprep.subr.mxu0 0.0
  %645 = vmatpush1.msra.mxu0 %v528
  %646 = vmatprep.subr.mxu0 0.0
  %647 = vmatpush1.msra.mxu0 %v531
  %648 = vmatprep.subr.mxu0 0.0
  %649 = vmatpush1.msra.mxu0 %v534
  %650 = vmatprep.subr.mxu0 0.0
  %651 = vmatpush1.msra.mxu0 %v537
  %652 = vmatprep.subr.mxu0 0.0
  %653 = vmatpush1.msra.mxu0 %v540
  %654 = vmatprep.subr.mxu0 0.0
  %655 = vmatpush1.msra.mxu0 %v543
  %656 = vmatprep.subr.mxu0 0.0
  %657 = vmatpush1.msra.mxu0 %v546
  %658 = vmatprep.subr.mxu0 0.0
  %659 = vmatpush1.msra.mxu0 %v549
  %660 = vmatprep.subr.mxu0 0.0
  %661 = vmatpush1.msra.mxu0 %v552
  %662 = vmatprep.subr.mxu0 0.0
  %663 = vmatpush1.msra.mxu0 0.0
  %664 = vmatprep.subr.mxu0 0.0
  %665 = vmatpush1.msra.mxu0 0.0
  %666 = vmatprep.subr.mxu0 0.0
  %667 = vmatpush1.msra.mxu0 0.0
  %668 = vmatprep.subr.mxu0 0.0
  %669 = vmatpush1.msra.mxu0 0.0
  %670 = vmatprep.subr.mxu0 0.0
  %671 = vmatpush1.msra.mxu0 0.0
  %672 = vmatprep.subr.mxu0 0.0
  %673 = vmatpush1.msra.mxu0 0.0
  %674 = vmatprep.subr.mxu0 0.0
  %675 = vmatpush1.msra.mxu0 0.0
  %676 = vmatprep.subr.mxu0 0.0
  %677 = vmatpush1.msra.mxu0 0.0
  %678 = vmatprep.subr.mxu0 0.0
  %679 = vmatpush1.msra.mxu0 0.0
  %680 = vmatprep.subr.mxu0 0.0
  %681 = vmatpush1.msra.mxu0 0.0
  %682 = vmatprep.subr.mxu0 0.0
  %683 = vmatpush1.msra.mxu0 0.0
  %684 = vmatprep.subr.mxu0 0.0
  %685 = vmatpush1.msra.mxu0 0.0
  %686 = vmatprep.subr.mxu0 0.0
  %687 = vmatpush1.msra.mxu0 0.0
  %688 = vmatprep.subr.mxu0 0.0
  %689 = vmatpush1.msra.mxu0 0.0
  %690 = vmatprep.subr.mxu0 0.0
  %691 = vmatpush1.msra.mxu0 0.0
  %692 = vmatprep.subr.mxu0 0.0
  %693 = vmatpush1.msra.mxu0 0.0
  %694 = vmatprep.mubr.f32.mxu0 0.0
  %695 = vmatmul.mubr.f32.gmra.mrb[0].mxu0 %v176
  %v696 = vpop.f32.mrb[0].mxu0
  %v697 = vadd.f32 0.0, %v696
  %v698 = vpop.f32.mrb[0].mxu0
  %699 = vmatprep.mubr.f32.mxu0 0.0
  %700 = vmatmul.mubr.f32.gmra.mrb[0].mxu0 %v177
  %v701 = vpop.f32.mrb[0].mxu0
  %v702 = vadd.f32 0.0, %v701
  %v703 = vpop.f32.mrb[0].mxu0
  %704 = vdwg.mxu0
  %706 = vset.pattern.permute.xlu0 0
  %707 = vperm.xlu0 %706, %v34
  %v708 = vpop.permute.xlu0 %707
  %711 = vset.pattern.permute.xlu0 0
  %712 = vperm.xlu0 %711, %v35
  %v713 = vpop.permute.xlu0 %712
  %v715 = vmul.f32 %v620, %v708
  %v716 = vmul.f32 %v622, %v708
  %v717 = vmul.f32 %v697, %v708
  %v718 = vmul.f32 %v626, %v713
  %v719 = vmul.f32 %v628, %v713
  %v720 = vmul.f32 %v702, %v713
  %v721 = vsub.f32 0.0, %v715
  %v722 = vsub.f32 0.0, %v716
  %v723 = vsub.f32 0.0, %v717
  %v724 = vsub.f32 0.0, %v718
  %v725 = vsub.f32 0.0, %v719
  %v726 = vsub.f32 0.0, %v720
  %v727 = vmul.f32 %v721, 1.442695
  %v728 = vpow.pop %v727
  %v729 = vmul.f32 %v722, 1.442695
  %v730 = vpow.pop %v729
  %v731 = vmul.f32 %v723, 1.442695
  %v732 = vpow.pop %v731
  %v733 = vmul.f32 %v724, 1.442695
  %v734 = vpow.pop %v733
  %v735 = vmul.f32 %v725, 1.442695
  %v736 = vpow.pop %v735
  %v737 = vmul.f32 %v726, 1.442695
  %v738 = vpow.pop %v737
  %v739 = vmul.f32 %v420, %v728
  %v740 = vmul.f32 %v495, %v730
  %v741 = vmul.f32 %v497, %v732
  %v742 = vmul.f32 %v426, %v734
  %v743 = vmul.f32 %v501, %v736
  %v744 = vmul.f32 %v503, %v738
  %v745 = vadd.f32 %v341, %v739
  %v746 = vadd.f32 %v343, %v740
  %v747 = vadd.f32 %v418, %v741
  %v748 = vadd.f32 %v347, %v742
  %v749 = vadd.f32 %v349, %v743
  %v750 = vadd.f32 %v424, %v744
  %v751 = vtanh.pop %v745
  %v752 = vtanh.pop %v746
  %v753 = vtanh.pop %v747
  %v754 = vtanh.pop %v748
  %v755 = vtanh.pop %v749
  %v756 = vtanh.pop %v750
  %v757 = vld [vmem:[%s6] sm:$0xff]
  %v758 = vld [vmem:[%s6 + $0x8] sm:$0xff]
  %v759 = vld [vmem:[%s6 + $0x10] sm:$0xff]
  %v760 = vld [vmem:[%s6 + $0x18] sm:$0xff]
  %v761 = vld [vmem:[%s6 + $0x20] sm:$0xff]
  %v762 = vld [vmem:[%s6 + $0x28] sm:$0xff]
  %v763 = vld [vmem:[%s6 + $0x30] sm:$0xff]
  %v764 = vld [vmem:[%s6 + $0x38] sm:$0xff]
  %v765 = vld [vmem:[%s6 + $0x40] sm:$0xff]
  %v766 = vld [vmem:[%s6 + $0x48] sm:$0xff]
  %v767 = vld [vmem:[%s6 + $0x50] sm:$0xff]
  %v768 = vld [vmem:[%s6 + $0x58] sm:$0xff]
  %v769 = vld [vmem:[%s6 + $0x60] sm:$0xff]
  %v770 = vld [vmem:[%s6 + $0x68] sm:$0xff]
  %v771 = vld [vmem:[%s6 + $0x70] sm:$0xff]
  %v772 = vld [vmem:[%s6 + $0x78] sm:$0xff]
  %v773 = vld [vmem:[%s6 + $0x80] sm:$0xff]
  %v774 = vld [vmem:[%s6 + $0x88] sm:$0xff]
  %v775 = vld [vmem:[%s6 + $0x90] sm:$0xff]
  %v776 = vld [vmem:[%s6 + $0x98] sm:$0xff]
  %v777 = vld [vmem:[%s6 + $0xa0] sm:$0xff]
  %v778 = vld [vmem:[%s6 + $0xa8] sm:$0xff]
  %v779 = vld [vmem:[%s6 + $0xb0] sm:$0xff]
  %v780 = vld [vmem:[%s6 + $0xb8] sm:$0xff]
  %v781 = vld [vmem:[%s6 + $0xc0] sm:$0xff]
  %v782 = vld [vmem:[%s6 + $0xc8] sm:$0xff]
  %v783 = vld [vmem:[%s6 + $0xd0] sm:$0xff]
  %v784 = vld [vmem:[%s6 + $0xd8] sm:$0xff]
  %v785 = vld [vmem:[%s6 + $0xe0] sm:$0xff]
  %v786 = vld [vmem:[%s6 + $0xe8] sm:$0xff]
  %v787 = vld [vmem:[%s6 + $0xf0] sm:$0xff]
  %v788 = vld [vmem:[%s6 + $0xf8] sm:$0xff]
  %v789 = vld [vmem:[%s6 + $0x100] sm:$0xff]
  %v790 = vld [vmem:[%s6 + $0x108] sm:$0xff]
  %v791 = vld [vmem:[%s6 + $0x110] sm:$0xff]
  %v792 = vld [vmem:[%s6 + $0x118] sm:$0xff]
  %v793 = vld [vmem:[%s6 + $0x120] sm:$0xff]
  %v794 = vld [vmem:[%s6 + $0x128] sm:$0xff]
  %v795 = vld [vmem:[%s6 + $0x130] sm:$0xff]
  %v796 = vld [vmem:[%s6 + $0x138] sm:$0xff]
  %v797 = vld [vmem:[%s6 + $0x140] sm:$0xff]
  %v798 = vld [vmem:[%s6 + $0x148] sm:$0xff]
  %v799 = vld [vmem:[%s6 + $0x150] sm:$0xff]
  %v800 = vld [vmem:[%s6 + $0x158] sm:$0xff]
  %v801 = vld [vmem:[%s6 + $0x160] sm:$0xff]
  %v802 = vld [vmem:[%s6 + $0x168] sm:$0xff]
  %v803 = vld [vmem:[%s6 + $0x170] sm:$0xff]
  %v804 = vld [vmem:[%s6 + $0x178] sm:$0xff]
  %v805 = vld [vmem:[%s7] sm:$0x1]
  %v807 = vlaneseq
  %v808 = vshrl.u32 %v807, 7
  %v809 = vsub.s32 0, %v808
  %v810 = vrot.slane %v805, %v809
  %812 = vmatprep.subr.mxu0 0.0
  %813 = vmatpush1.msra.mxu0 %v757
  %814 = vmatprep.subr.mxu0 0.0
  %815 = vmatpush1.msra.mxu0 %v758
  %816 = vmatprep.subr.mxu0 0.0
  %817 = vmatpush1.msra.mxu0 %v759
  %818 = vmatprep.subr.mxu0 0.0
  %819 = vmatpush1.msra.mxu0 %v760
  %820 = vmatprep.subr.mxu0 0.0
  %821 = vmatpush1.msra.mxu0 %v761
  %822 = vmatprep.subr.mxu0 0.0
  %823 = vmatpush1.msra.mxu0 %v762
  %824 = vmatprep.subr.mxu0 0.0
  %825 = vmatpush1.msra.mxu0 %v763
  %826 = vmatprep.subr.mxu0 0.0
  %827 = vmatpush1.msra.mxu0 %v764
  %828 = vmatprep.subr.mxu0 0.0
  %829 = vmatpush1.msra.mxu0 %v765
  %830 = vmatprep.subr.mxu0 0.0
  %831 = vmatpush1.msra.mxu0 %v766
  %832 = vmatprep.subr.mxu0 0.0
  %833 = vmatpush1.msra.mxu0 %v767
  %834 = vmatprep.subr.mxu0 0.0
  %835 = vmatpush1.msra.mxu0 %v768
  %836 = vmatprep.subr.mxu0 0.0
  %837 = vmatpush1.msra.mxu0 %v769
  %838 = vmatprep.subr.mxu0 0.0
  %839 = vmatpush1.msra.mxu0 %v770
  %840 = vmatprep.subr.mxu0 0.0
  %841 = vmatpush1.msra.mxu0 %v771
  %842 = vmatprep.subr.mxu0 0.0
  %843 = vmatpush1.msra.mxu0 %v772
  %844 = vmatprep.subr.mxu0 0.0
  %845 = vmatpush1.msra.mxu0 %v773
  %846 = vmatprep.subr.mxu0 0.0
  %847 = vmatpush1.msra.mxu0 %v774
  %848 = vmatprep.subr.mxu0 0.0
  %849 = vmatpush1.msra.mxu0 %v775
  %850 = vmatprep.subr.mxu0 0.0
  %851 = vmatpush1.msra.mxu0 %v776
  %852 = vmatprep.subr.mxu0 0.0
  %853 = vmatpush1.msra.mxu0 %v777
  %854 = vmatprep.subr.mxu0 0.0
  %855 = vmatpush1.msra.mxu0 %v778
  %856 = vmatprep.subr.mxu0 0.0
  %857 = vmatpush1.msra.mxu0 %v779
  %858 = vmatprep.subr.mxu0 0.0
  %859 = vmatpush1.msra.mxu0 %v780
  %860 = vmatprep.subr.mxu0 0.0
  %861 = vmatpush1.msra.mxu0 %v781
  %862 = vmatprep.subr.mxu0 0.0
  %863 = vmatpush1.msra.mxu0 %v782
  %864 = vmatprep.subr.mxu0 0.0
  %865 = vmatpush1.msra.mxu0 %v783
  %866 = vmatprep.subr.mxu0 0.0
  %867 = vmatpush1.msra.mxu0 %v784
  %868 = vmatprep.subr.mxu0 0.0
  %869 = vmatpush1.msra.mxu0 %v785
  %870 = vmatprep.subr.mxu0 0.0
  %871 = vmatpush1.msra.mxu0 %v786
  %872 = vmatprep.subr.mxu0 0.0
  %873 = vmatpush1.msra.mxu0 %v787
  %874 = vmatprep.subr.mxu0 0.0
  %875 = vmatpush1.msra.mxu0 %v788
  %876 = vmatprep.mubr.f32.mxu0 %v752
  %877 = vmatmul.mubr.f32.gmra.mrb[0].mxu0 %v751
  %v878 = vpop.f32.mrb[0].mxu0
  %v879 = vadd.f32 %v810, %v878
  %v880 = vpop.f32.mrb[0].mxu0
  %881 = vmatprep.mubr.f32.mxu0 %v755
  %882 = vmatmul.mubr.f32.gmra.mrb[0].mxu0 %v754
  %v883 = vpop.f32.mrb[0].mxu0
  %v884 = vadd.f32 %v810, %v883
  %v885 = vpop.f32.mrb[0].mxu0
  %886 = vdwg.mxu0
  %887 = vmatprep.subr.mxu0 0.0
  %888 = vmatpush1.msra.mxu0 %v789
  %889 = vmatprep.subr.mxu0 0.0
  %890 = vmatpush1.msra.mxu0 %v790
  %891 = vmatprep.subr.mxu0 0.0
  %892 = vmatpush1.msra.mxu0 %v791
  %893 = vmatprep.subr.mxu0 0.0
  %894 = vmatpush1.msra.mxu0 %v792
  %895 = vmatprep.subr.mxu0 0.0
  %896 = vmatpush1.msra.mxu0 %v793
  %897 = vmatprep.subr.mxu0 0.0
  %898 = vmatpush1.msra.mxu0 %v794
  %899 = vmatprep.subr.mxu0 0.0
  %900 = vmatpush1.msra.mxu0 %v795
  %901 = vmatprep.subr.mxu0 0.0
  %902 = vmatpush1.msra.mxu0 %v796
  %903 = vmatprep.subr.mxu0 0.0
  %904 = vmatpush1.msra.mxu0 %v797
  %905 = vmatprep.subr.mxu0 0.0
  %906 = vmatpush1.msra.mxu0 %v798
  %907 = vmatprep.subr.mxu0 0.0
  %908 = vmatpush1.msra.mxu0 %v799
  %909 = vmatprep.subr.mxu0 0.0
  %910 = vmatpush1.msra.mxu0 %v800
  %911 = vmatprep.subr.mxu0 0.0
  %912 = vmatpush1.msra.mxu0 %v801
  %913 = vmatprep.subr.mxu0 0.0
  %914 = vmatpush1.msra.mxu0 %v802
  %915 = vmatprep.subr.mxu0 0.0
  %916 = vmatpush1.msra.mxu0 %v803
  %917 = vmatprep.subr.mxu0 0.0
  %918 = vmatpush1.msra.mxu0 %v804
  %919 = vmatprep.subr.mxu0 0.0
  %920 = vmatpush1.msra.mxu0 0.0
  %921 = vmatprep.subr.mxu0 0.0
  %922 = vmatpush1.msra.mxu0 0.0
  %923 = vmatprep.subr.mxu0 0.0
  %924 = vmatpush1.msra.mxu0 0.0
  %925 = vmatprep.subr.mxu0 0.0
  %926 = vmatpush1.msra.mxu0 0.0
  %927 = vmatprep.subr.mxu0 0.0
  %928 = vmatpush1.msra.mxu0 0.0
  %929 = vmatprep.subr.mxu0 0.0
  %930 = vmatpush1.msra.mxu0 0.0
  %931 = vmatprep.subr.mxu0 0.0
  %932 = vmatpush1.msra.mxu0 0.0
  %933 = vmatprep.subr.mxu0 0.0
  %934 = vmatpush1.msra.mxu0 0.0
  %935 = vmatprep.subr.mxu0 0.0
  %936 = vmatpush1.msra.mxu0 0.0
  %937 = vmatprep.subr.mxu0 0.0
  %938 = vmatpush1.msra.mxu0 0.0
  %939 = vmatprep.subr.mxu0 0.0
  %940 = vmatpush1.msra.mxu0 0.0
  %941 = vmatprep.subr.mxu0 0.0
  %942 = vmatpush1.msra.mxu0 0.0
  %943 = vmatprep.subr.mxu0 0.0
  %944 = vmatpush1.msra.mxu0 0.0
  %945 = vmatprep.subr.mxu0 0.0
  %946 = vmatpush1.msra.mxu0 0.0
  %947 = vmatprep.subr.mxu0 0.0
  %948 = vmatpush1.msra.mxu0 0.0
  %949 = vmatprep.subr.mxu0 0.0
  %950 = vmatpush1.msra.mxu0 0.0
  %951 = vmatprep.mubr.f32.mxu0 0.0
  %952 = vmatmul.mubr.f32.gmra.mrb[0].mxu0 %v753
  %v953 = vpop.f32.mrb[0].mxu0
  %v954 = vadd.f32 %v879, %v953
  %v955 = vpop.f32.mrb[0].mxu0
  %956 = vmatprep.mubr.f32.mxu0 0.0
  %957 = vmatmul.mubr.f32.gmra.mrb[0].mxu0 %v756
  %v958 = vpop.f32.mrb[0].mxu0
  %v959 = vadd.f32 %v884, %v958
  %v960 = vpop.f32.mrb[0].mxu0
  %961 = vdwg.mxu0
  %vm962 = vcmp.gt.f32.partialorder %v954, 20.0
  %vm963 = vcmp.gt.f32.partialorder %v959, 20.0
  %v964 = vmin.f32 %v954, 20.0
  %v965 = vmin.f32 %v959, 20.0
  %v966 = vmul.f32 %v964, 1.442695
  %v967 = vpow.pop %v966
  %v968 = vmul.f32 %v965, 1.442695
  %v969 = vpow.pop %v968
  %v970 = vadd.f32 %v967, 1.0
  %v971 = vadd.f32 %v969, 1.0
  %v972 = vlog2.pop %v970
  %v973 = vmul.f32 %v972, 0.6931472
  %v974 = vlog2.pop %v971
  %v975 = vmul.f32 %v974, 0.6931472
  %v976 = vsel %vm962, %v954, %v973
  %v977 = vsel %vm963, %v959, %v975
  %v978 = vld [vmem:[%s8] sm:$0xff]
  %v979 = vld [vmem:[%s8 + $0x8] sm:$0xff]
  %v980 = vld [vmem:[%s8 + $0x10] sm:$0xff]
  %v981 = vld [vmem:[%s8 + $0x18] sm:$0xff]
  %v982 = vld [vmem:[%s8 + $0x20] sm:$0xff]
  %v983 = vld [vmem:[%s8 + $0x28] sm:$0xff]
  %v984 = vld [vmem:[%s8 + $0x30] sm:$0xff]
  %v985 = vld [vmem:[%s8 + $0x38] sm:$0xff]
  %v986 = vld [vmem:[%s8 + $0x40] sm:$0xff]
  %v987 = vld [vmem:[%s8 + $0x48] sm:$0xff]
  %v988 = vld [vmem:[%s8 + $0x50] sm:$0xff]
  %v989 = vld [vmem:[%s8 + $0x58] sm:$0xff]
  %v990 = vld [vmem:[%s8 + $0x60] sm:$0xff]
  %v991 = vld [vmem:[%s8 + $0x68] sm:$0xff]
  %v992 = vld [vmem:[%s8 + $0x70] sm:$0xff]
  %v993 = vld [vmem:[%s8 + $0x78] sm:$0xff]
  %994 = vmatprep.subr.mxu0 0.0
  %995 = vmatpush1.msra.mxu0 %v978
  %996 = vmatprep.subr.mxu0 0.0
  %997 = vmatpush1.msra.mxu0 %v979
  %998 = vmatprep.subr.mxu0 0.0
  %999 = vmatpush1.msra.mxu0 %v980
  %1000 = vmatprep.subr.mxu0 0.0
  %1001 = vmatpush1.msra.mxu0 %v981
  %1002 = vmatprep.subr.mxu0 0.0
  %1003 = vmatpush1.msra.mxu0 %v982
  %1004 = vmatprep.subr.mxu0 0.0
  %1005 = vmatpush1.msra.mxu0 %v983
  %1006 = vmatprep.subr.mxu0 0.0
  %1007 = vmatpush1.msra.mxu0 %v984
  %1008 = vmatprep.subr.mxu0 0.0
  %1009 = vmatpush1.msra.mxu0 %v985
  %1010 = vmatprep.subr.mxu0 0.0
  %1011 = vmatpush1.msra.mxu0 %v986
  %1012 = vmatprep.subr.mxu0 0.0
  %1013 = vmatpush1.msra.mxu0 %v987
  %1014 = vmatprep.subr.mxu0 0.0
  %1015 = vmatpush1.msra.mxu0 %v988
  %1016 = vmatprep.subr.mxu0 0.0
  %1017 = vmatpush1.msra.mxu0 %v989
  %1018 = vmatprep.subr.mxu0 0.0
  %1019 = vmatpush1.msra.mxu0 %v990
  %1020 = vmatprep.subr.mxu0 0.0
  %1021 = vmatpush1.msra.mxu0 %v991
  %1022 = vmatprep.subr.mxu0 0.0
  %1023 = vmatpush1.msra.mxu0 %v992
  %1024 = vmatprep.subr.mxu0 0.0
  %1025 = vmatpush1.msra.mxu0 %v993
  %1026 = vmatprep.subr.mxu0 0.0
  %1027 = vmatpush1.msra.mxu0 0.0
  %1028 = vmatprep.subr.mxu0 0.0
  %1029 = vmatpush1.msra.mxu0 0.0
  %1030 = vmatprep.subr.mxu0 0.0
  %1031 = vmatpush1.msra.mxu0 0.0
  %1032 = vmatprep.subr.mxu0 0.0
  %1033 = vmatpush1.msra.mxu0 0.0
  %1034 = vmatprep.subr.mxu0 0.0
  %1035 = vmatpush1.msra.mxu0 0.0
  %1036 = vmatprep.subr.mxu0 0.0
  %1037 = vmatpush1.msra.mxu0 0.0
  %1038 = vmatprep.subr.mxu0 0.0
  %1039 = vmatpush1.msra.mxu0 0.0
  %1040 = vmatprep.subr.mxu0 0.0
  %1041 = vmatpush1.msra.mxu0 0.0
  %1042 = vmatprep.subr.mxu0 0.0
  %1043 = vmatpush1.msra.mxu0 0.0
  %1044 = vmatprep.subr.mxu0 0.0
  %1045 = vmatpush1.msra.mxu0 0.0
  %1046 = vmatprep.subr.mxu0 0.0
  %1047 = vmatpush1.msra.mxu0 0.0
  %1048 = vmatprep.subr.mxu0 0.0
  %1049 = vmatpush1.msra.mxu0 0.0
  %1050 = vmatprep.subr.mxu0 0.0
  %1051 = vmatpush1.msra.mxu0 0.0
  %1052 = vmatprep.subr.mxu0 0.0
  %1053 = vmatpush1.msra.mxu0 0.0
  %1054 = vmatprep.subr.mxu0 0.0
  %1055 = vmatpush1.msra.mxu0 0.0
  %1056 = vmatprep.subr.mxu0 0.0
  %1057 = vmatpush1.msra.mxu0 0.0
  %1058 = vmatprep.mubr.f32.mxu0 0.0
  %1059 = vmatmul.mubr.f32.gmra.mrb[0].mxu0 %v976
  %v1060 = vpop.f32.mrb[0].mxu0
  %v1061 = vadd.f32 0.0, %v1060
  %v1062 = vpop.f32.mrb[0].mxu0
  %1063 = vmatprep.mubr.f32.mxu0 0.0
  %1064 = vmatmul.mubr.f32.gmra.mrb[0].mxu0 %v977
  %v1065 = vpop.f32.mrb[0].mxu0
  %v1066 = vadd.f32 0.0, %v1065
  %v1067 = vpop.f32.mrb[0].mxu0
  %1068 = vdwg.mxu0
  %v1069 = vlaneseq
  %v1070 = vand.u32 %v1069, 127
  %vm1071 = vcmp.lt.s32.totalorder %v1070, 4
  %v1072 = vsel %vm1071, %v708, 1.0
  %v1073 = vsel %vm1071, %v713, 1.0
  %v1074 = vmul.f32 %v1061, %v1072
  %v1075 = vmul.f32 %v1066, %v1073
  %1076 = vst [vmem:[%s9] sm:$0xff] %v1074
  %1077 = vst [vmem:[%s9 + $0x8] sm:$0xff] %v1075
  // Predicated region
  $region38: #{sahp_forward.1} parent=0 // pred_check
    _
  $region39: #{sahp_forward.1} parent=0 // pred_check_branch
    %1079 = sbr.rel (0) target = $region41
  $region40: #{sahp_forward.1} parent=0 // pred_region
    _
  $region41: #{sahp_forward.1} parent=0 // pred_fallthru
    _
  // Predicated region
  $region42: #{sahp_forward.1} parent=0 // pred_check
    _
  $region43: #{sahp_forward.1} parent=0 // pred_check_branch
    %1081 = sbr.rel (0) target = $region45
  $region44: #{sahp_forward.1} parent=0 // pred_region
    _
  $region45: #{sahp_forward.1} parent=0 // pred_fallthru
    _

</llo_original>
